<compile_context>
chip_gen: v5e
topology: v5e:2x2
jax: 0.10.0
libtpu: 0.0.40
codegen_flags: <defaults>
</compile_context>

<pallas_src>
import functools

import jax
import jax.numpy as jnp
from jax import lax
from jax.experimental import pallas as pl
from jax.experimental.pallas import tpu as pltpu


# ----------------------------------------------------------------------------
# Pallas kernel
# ----------------------------------------------------------------------------
def _mixed_conv_kernel(arc_ref, x_ref, w_ref, b_ref, o_ref, *, kmax, th, W):
    """Fused im2col + selected-branch conv for one (sample, row-band) tile.

    arc_ref: SMEM (N,) int32 scalar prefetch; consumed by the index_maps
             (branch selection), unused in the body.
    x_ref:   (Cin, Hp, Wp)       bf16 zero-padded input plane of sample n.
    w_ref:   (kmax*kmax, Cout_p, Cin) bf16 selected branch, one matrix per tap.
    b_ref:   (Cout_p, 1)         f32 selected branch bias.
    o_ref:   (Cout_p, th*W)      f32 output tile (lane-dense over spatial pos).
    """
    del arc_ref
    Cin, Hp, _ = x_ref.shape
    halo = kmax - 1
    thw = th * W

    i = pl.program_id(1)
    row0 = i * th
    if th % 8 == 0:
        row0 = pl.multiple_of(row0, 8)

    # One load of the halo'd row band for this tile (full ref when untiled).
    if th + halo == Hp:
        band = x_ref[...]                                  # (Cin, Hp, Wp)
    else:
        band = x_ref[:, pl.ds(row0, th + halo), :]         # (Cin, th+halo, Wp)

    acc = jnp.zeros(o_ref.shape, jnp.float32)
    for dx in range(kmax):
        # Fixed-dx column window, flattened so the taps that differ only in dy
        # become contiguous lane slices of length th*W (one reshape per dx
        # instead of one per tap).
        band_dx = band[:, :, dx:dx + W].reshape(Cin, (th + halo) * W)
        for dy in range(kmax):
            t = dy * kmax + dx
            xt = band_dx[:, dy * W: dy * W + thw]          # (Cin, thw) bf16
            acc = acc + jnp.dot(w_ref[t], xt,
                                preferred_element_type=jnp.float32)
    o_ref[...] = (acc + b_ref[...]).astype(o_ref.dtype)


# ----------------------------------------------------------------------------
# Tile selection (budget-driven, lane-dense output tiles)
# ----------------------------------------------------------------------------
def _pick_row_tile(H, W, Cin, Cout_p, KK, Hp, Wp, kmax, budget_bytes=20 << 20):
    """Largest row tile th (th | H) whose pipelined VMEM footprint fits budget.

    Output lane tiles stay 128-dense: th == H (block == full dim) or th*W a
    multiple of 128 (unmasked stores, clean MXU columns).
    """
    def est(th):
        x_b = 2 * Cin * Hp * Wp * 2                  # double-buffered bf16 input
        w_b = 2 * KK * Cout_p * Cin * 2              # double-buffered bf16 weights
        b_b = 2 * Cout_p * 4
        o_b = 2 * Cout_p * th * W * 4                # double-buffered f32 output
        live = (Cout_p * th * W * 4                  # f32 accumulator
                + 2 * Cin * (th + kmax - 1) * Wp * 2)  # loaded band values
        return x_b + w_b + b_b + o_b + live

    candidates = [d for d in range(H, 0, -1)
                  if H % d == 0 and (d == H or (d * W) % 128 == 0)]
    for th in candidates:
        if est(th) <= budget_bytes:
            return th, H // th
    # Nothing fits the budget: fall back to the smallest legal tile.
    # TODO(synk): manual halo'd row-band DMA (memory_space=pl.ANY) for inputs
    # whose full per-sample plane does not fit VMEM.
    th = candidates[-1]
    return th, H // th


# ----------------------------------------------------------------------------
# Forward wrapper
# ----------------------------------------------------------------------------
@functools.partial(jax.jit, static_argnames=("kmax",))
def mixed_layer_forward(x_nchw, w_fused, b_fused, sample_arc, *, kmax):
    """x: (N, Cin, H, W); w_fused: (B, kmax*kmax, Cout_p, Cin) bf16;
    b_fused: (B, Cout_p, 1) f32; sample_arc: (N,) int."""
    N, Cin, H, W = x_nchw.shape
    B, KK, Cout_p, Cin_w = w_fused.shape
    assert KK == kmax * kmax and Cin_w == Cin

    pad = kmax // 2
    Hp, Wp = H + 2 * pad, W + 2 * pad

    # Clamp so a bad arc can't trigger an unchecked OOB DMA on TPU.
    # (Semantic deviation from torch, which would raise on an invalid index.)
    arc = jnp.clip(sample_arc.astype(jnp.int32), 0, B - 1)

    # bf16 input, zero-padded spatially once (cheap; no im2col materialized).
    xp = jnp.pad(x_nchw.astype(jnp.bfloat16),
                 ((0, 0), (0, 0), (pad, pad), (pad, pad)))

    th, n_h = _pick_row_tile(H, W, Cin, Cout_p, KK, Hp, Wp, kmax)
    thw = th * W

    kernel = functools.partial(_mixed_conv_kernel, kmax=kmax, th=th, W=W)

    flops = 2 * N * Cout_p * KK * Cin * H * W
    bytes_accessed = (N * Cin * Hp * Wp * 2          # bf16 padded input
                      + N * KK * Cout_p * Cin * 2    # bf16 selected weights
                      + N * Cout_p * 4               # f32 bias
                      + N * Cout_p * H * W * 4)      # f32 output

    grid_spec = pltpu.PrefetchScalarGridSpec(
        num_scalar_prefetch=1,
        grid=(N, n_h),
        in_specs=[
            # Padded input plane: constant over the inner axis, so it is only
            # DMA'd once per sample and reused across row bands.
            pl.BlockSpec((None, Cin, Hp, Wp), lambda n, i, a: (n, 0, 0, 0)),
            # Weight / bias: branch chosen by the prefetched sample_arc[n];
            # repeated branch indices are not re-fetched.
            pl.BlockSpec((None, KK, Cout_p, Cin), lambda n, i, a: (a[n], 0, 0, 0)),
            pl.BlockSpec((None, Cout_p, 1), lambda n, i, a: (a[n], 0, 0)),
        ],
        out_specs=pl.BlockSpec((None, Cout_p, thw), lambda n, i, a: (n, 0, i)),
    )

    out = pl.pallas_call(
        kernel,
        out_shape=jax.ShapeDtypeStruct((N, Cout_p, H * W), jnp.float32),
        grid_spec=grid_spec,
        compiler_params=pltpu.CompilerParams(
            dimension_semantics=("parallel", "parallel"),
            vmem_limit_bytes=32 * 1024 * 1024),
        cost_estimate=pl.CostEstimate(flops=flops, transcendentals=0,
                                      bytes_accessed=bytes_accessed),
    )(arc, xp, w_fused, b_fused)

    # (N, Cout_p, H*W) -> NCHW, a pure metadata reshape.
    return out.reshape(N, Cout_p, H, W)


# ----------------------------------------------------------------------------
# MixedLayer (JAX/Pallas port)
# ----------------------------------------------------------------------------
_OP_KERNEL_SIZE = {"conv_1x1": 1, "conv_3x3": 3, "conv_5x5": 5}


class MixedLayerPallas:
    """JAX/Pallas port of PAGAN's MixedLayer forward pass."""

    def __init__(self, layer_id, in_planes, out_planes, ops, key,
                 track_running_stats=False, scalesample=None):
        # TODO(synk): the PAGAN OPS registry isn't provided; branches are
        # synthesized as plain same-padded Conv2d ops listed in `ops`.
        # TODO(synk): scalesample (optional resize op) not implemented (None).
        self.layer_id = layer_id
        self.out_planes = out_planes
        self.ops = ops
        self.scalesample = scalesample
        self.kmax = max(_OP_KERNEL_SIZE[op] for op in ops)
        self.cout_p = -(-out_planes // 8) * 8        # sublane-aligned Cout

        # Native per-branch parameters (kept f32 for the pure-JAX reference).
        self.params = []
        for i, op in enumerate(ops):
            k = _OP_KERNEL_SIZE[op]
            kw_key, kb_key = jax.random.split(jax.random.fold_in(key, i))
            fan_in = in_planes * k * k
            w = jax.random.normal(kw_key, (out_planes, in_planes, k, k),
                                  jnp.float32) * (1.0 / jnp.sqrt(fan_in))
            b = jax.random.normal(kb_key, (out_planes,), jnp.float32) * 0.1
            self.params.append((w, b))

        # Fused, branch-selectable weights: every branch zero-padded to
        # kmax x kmax so the tap count is shared, stored per tap as a
        # (Cout_p, Cin) matrix in bf16 -> (B, kmax*kmax, Cout_p, Cin).
        wmats, biases = [], []
        pad_c = self.cout_p - out_planes
        for (w, b), op in zip(self.params, ops):
            k = _OP_KERNEL_SIZE[op]
            p = (self.kmax - k) // 2
            wp = jnp.pad(w, ((0, pad_c), (0, 0), (p, p), (p, p)))
            wmats.append(jnp.transpose(wp, (2, 3, 0, 1))
                         .reshape(self.kmax * self.kmax, self.cout_p, in_planes))
            biases.append(jnp.pad(b, (0, pad_c)))
        self.w_fused = jnp.stack(wmats, axis=0).astype(jnp.bfloat16)
        self.b_fused = jnp.stack(biases, axis=0).reshape(
            len(ops), self.cout_p, 1).astype(jnp.float32)

    def __call__(self, x_nchw, sample_arc):
        out = mixed_layer_forward(x_nchw, self.w_fused, self.b_fused,
                                  sample_arc, kmax=self.kmax)
        return out[:, :self.out_planes]


# ----------------------------------------------------------------------------
# Pure-JAX reference for validation (all branches + one-hot mixing, like torch)
# ----------------------------------------------------------------------------
def ref_forward(x_nchw, params, sample_arc, num_branch):
    # Model the kernel's bf16 input/weight quantization (f32 accumulation).
    xq = x_nchw.astype(jnp.bfloat16).astype(jnp.float32)
    outs = []
    for (w, b) in params:
        wq = w.astype(jnp.bfloat16).astype(jnp.float32)
        pad = w.shape[2] // 2
        y = lax.conv_general_dilated(
            xq, wq, (1, 1), [(pad, pad), (pad, pad)],
            dimension_numbers=("NCHW", "OIHW", "NCHW"))
        outs.append(y + b.reshape(1, -1, 1, 1))
    stacked = jnp.stack(outs, axis=1)                      # (N, B, Cout, H, W)
    oh = jax.nn.one_hot(sample_arc, num_branch, dtype=jnp.float32)
    oh = oh.reshape(oh.shape[0], num_branch, 1, 1, 1)
    return jnp.sum(oh * stacked, axis=1)


if __name__ == "__main__":
    key = jax.random.PRNGKey(0)
    k_x, k_p = jax.random.split(key)

    N, Cin, Cout, H = 2, 4, 8, 16
    ops = ("conv_1x1", "conv_3x3", "conv_5x5")

    x = jax.random.normal(k_x, (N, Cin, H, H), jnp.float32)
    layer = MixedLayerPallas(layer_id=0, in_planes=Cin, out_planes=Cout,
                             ops=ops, key=k_p)

    for arcs in (jnp.array([2, 0], dtype=jnp.int32),
                 jnp.array([1, 1], dtype=jnp.int32)):
        out = layer(x, arcs)
        out = jax.block_until_ready(out)
        ref = ref_forward(x, layer.params, arcs, len(ops))
        assert out.shape == (N, Cout, H, H), out.shape
        err = float(jnp.max(jnp.abs(out - ref)))
        assert jnp.allclose(out, ref, atol=1e-2, rtol=1e-2), err

    print("KERNEL_OK")
</pallas_src>

<mosaic_0001>
module attributes {stable_mosaic.version = 11 : i64} {
  func.func @_mixed_conv_kernel(%arg0: i32, %arg1: i32, %arg2: memref<2xi32, #tpu.memory_space<smem>>, %arg3: memref<1x4x20x20xbf16, #tpu.memory_space<vmem>>, %arg4: memref<1x25x8x4xbf16, #tpu.memory_space<vmem>>, %arg5: memref<1x8x1xf32, #tpu.memory_space<vmem>>, %arg6: memref<1x8x256xf32, #tpu.memory_space<vmem>>) attributes {dimension_semantics = [#tpu.dimension_semantics<parallel>, #tpu.dimension_semantics<parallel>], iteration_bounds = array<i64: 2, 1>, scalar_prefetch = 1 : i64, scratch_operands = 0 : i64, tpu.core_type = #tpu.core_type<tc>, window_params = [{transform_indices = @transform_0, window_bounds = array<i64: 1, 4, 20, 20>}, {transform_indices = @transform_1, window_bounds = array<i64: 1, 25, 8, 4>}, {transform_indices = @transform_2, window_bounds = array<i64: 1, 8, 1>}, {transform_indices = @transform_3, window_bounds = array<i64: 1, 8, 256>}]} {
    %c0 = arith.constant 0 : index
    %c0_0 = arith.constant 0 : index
    %c0_1 = arith.constant 0 : index
    %c0_2 = arith.constant 0 : index
    %0 = vector.load %arg3[%c0, %c0_0, %c0_1, %c0_2] : memref<1x4x20x20xbf16, #tpu.memory_space<vmem>>, vector<1x4x20x20xbf16>
    %1 = vector.shape_cast %0 : vector<1x4x20x20xbf16> to vector<4x20x20xbf16>
    %cst = arith.constant 0.000000e+00 : f32
    %2 = vector.broadcast %cst : f32 to vector<8x256xf32>
    %3 = vector.extract_strided_slice %1 {offsets = [0, 0, 0], sizes = [4, 20, 16], strides = [1, 1, 1]} : vector<4x20x20xbf16> to vector<4x20x16xbf16>
    %4 = vector.shape_cast %3 : vector<4x20x16xbf16> to vector<4x320xbf16>
    %5 = vector.extract_strided_slice %4 {offsets = [0, 0], sizes = [4, 256], strides = [1, 1]} : vector<4x320xbf16> to vector<4x256xbf16>
    %c0_3 = arith.constant 0 : index
    %c0_4 = arith.constant 0 : index
    %c0_5 = arith.constant 0 : index
    %c0_6 = arith.constant 0 : index
    %6 = vector.load %arg4[%c0_3, %c0_4, %c0_5, %c0_6] : memref<1x25x8x4xbf16, #tpu.memory_space<vmem>>, vector<1x1x8x4xbf16>
    %7 = vector.shape_cast %6 : vector<1x1x8x4xbf16> to vector<8x4xbf16>
    %cst_7 = arith.constant dense<0.000000e+00> : vector<8x256xf32>
    %8 = tpu.matmul %7, %5, %cst_7 {dimension_numbers = #tpu.dot_dimension_numbers<[1], [0], [0], [1], [0, 0, 1, 1], [], []>} : vector<8x4xbf16>, vector<4x256xbf16>, vector<8x256xf32> -> vector<8x256xf32>
    %9 = arith.addf %2, %8 : vector<8x256xf32>
    %10 = vector.extract_strided_slice %4 {offsets = [0, 16], sizes = [4, 256], strides = [1, 1]} : vector<4x320xbf16> to vector<4x256xbf16>
    %c0_8 = arith.constant 0 : index
    %c5 = arith.constant 5 : index
    %c0_9 = arith.constant 0 : index
    %c0_10 = arith.constant 0 : index
    %11 = vector.load %arg4[%c0_8, %c5, %c0_9, %c0_10] : memref<1x25x8x4xbf16, #tpu.memory_space<vmem>>, vector<1x1x8x4xbf16>
    %12 = vector.shape_cast %11 : vector<1x1x8x4xbf16> to vector<8x4xbf16>
    %cst_11 = arith.constant dense<0.000000e+00> : vector<8x256xf32>
    %13 = tpu.matmul %12, %10, %cst_11 {dimension_numbers = #tpu.dot_dimension_numbers<[1], [0], [0], [1], [0, 0, 1, 1], [], []>} : vector<8x4xbf16>, vector<4x256xbf16>, vector<8x256xf32> -> vector<8x256xf32>
    %14 = arith.addf %9, %13 : vector<8x256xf32>
    %15 = vector.extract_strided_slice %4 {offsets = [0, 32], sizes = [4, 256], strides = [1, 1]} : vector<4x320xbf16> to vector<4x256xbf16>
    %c0_12 = arith.constant 0 : index
    %c10 = arith.constant 10 : index
    %c0_13 = arith.constant 0 : index
    %c0_14 = arith.constant 0 : index
    %16 = vector.load %arg4[%c0_12, %c10, %c0_13, %c0_14] : memref<1x25x8x4xbf16, #tpu.memory_space<vmem>>, vector<1x1x8x4xbf16>
    %17 = vector.shape_cast %16 : vector<1x1x8x4xbf16> to vector<8x4xbf16>
    %cst_15 = arith.constant dense<0.000000e+00> : vector<8x256xf32>
    %18 = tpu.matmul %17, %15, %cst_15 {dimension_numbers = #tpu.dot_dimension_numbers<[1], [0], [0], [1], [0, 0, 1, 1], [], []>} : vector<8x4xbf16>, vector<4x256xbf16>, vector<8x256xf32> -> vector<8x256xf32>
    %19 = arith.addf %14, %18 : vector<8x256xf32>
    %20 = vector.extract_strided_slice %4 {offsets = [0, 48], sizes = [4, 256], strides = [1, 1]} : vector<4x320xbf16> to vector<4x256xbf16>
    %c0_16 = arith.constant 0 : index
    %c15 = arith.constant 15 : index
    %c0_17 = arith.constant 0 : index
    %c0_18 = arith.constant 0 : index
    %21 = vector.load %arg4[%c0_16, %c15, %c0_17, %c0_18] : memref<1x25x8x4xbf16, #tpu.memory_space<vmem>>, vector<1x1x8x4xbf16>
    %22 = vector.shape_cast %21 : vector<1x1x8x4xbf16> to vector<8x4xbf16>
    %cst_19 = arith.constant dense<0.000000e+00> : vector<8x256xf32>
    %23 = tpu.matmul %22, %20, %cst_19 {dimension_numbers = #tpu.dot_dimension_numbers<[1], [0], [0], [1], [0, 0, 1, 1], [], []>} : vector<8x4xbf16>, vector<4x256xbf16>, vector<8x256xf32> -> vector<8x256xf32>
    %24 = arith.addf %19, %23 : vector<8x256xf32>
    %25 = vector.extract_strided_slice %4 {offsets = [0, 64], sizes = [4, 256], strides = [1, 1]} : vector<4x320xbf16> to vector<4x256xbf16>
    %c0_20 = arith.constant 0 : index
    %c20 = arith.constant 20 : index
    %c0_21 = arith.constant 0 : index
    %c0_22 = arith.constant 0 : index
    %26 = vector.load %arg4[%c0_20, %c20, %c0_21, %c0_22] : memref<1x25x8x4xbf16, #tpu.memory_space<vmem>>, vector<1x1x8x4xbf16>
    %27 = vector.shape_cast %26 : vector<1x1x8x4xbf16> to vector<8x4xbf16>
    %cst_23 = arith.constant dense<0.000000e+00> : vector<8x256xf32>
    %28 = tpu.matmul %27, %25, %cst_23 {dimension_numbers = #tpu.dot_dimension_numbers<[1], [0], [0], [1], [0, 0, 1, 1], [], []>} : vector<8x4xbf16>, vector<4x256xbf16>, vector<8x256xf32> -> vector<8x256xf32>
    %29 = arith.addf %24, %28 : vector<8x256xf32>
    %30 = vector.extract_strided_slice %1 {offsets = [0, 0, 1], sizes = [4, 20, 16], strides = [1, 1, 1]} : vector<4x20x20xbf16> to vector<4x20x16xbf16>
    %31 = vector.shape_cast %30 : vector<4x20x16xbf16> to vector<4x320xbf16>
    %32 = vector.extract_strided_slice %31 {offsets = [0, 0], sizes = [4, 256], strides = [1, 1]} : vector<4x320xbf16> to vector<4x256xbf16>
    %c0_24 = arith.constant 0 : index
    %c1 = arith.constant 1 : index
    %c0_25 = arith.constant 0 : index
    %c0_26 = arith.constant 0 : index
    %33 = vector.load %arg4[%c0_24, %c1, %c0_25, %c0_26] : memref<1x25x8x4xbf16, #tpu.memory_space<vmem>>, vector<1x1x8x4xbf16>
    %34 = vector.shape_cast %33 : vector<1x1x8x4xbf16> to vector<8x4xbf16>
    %cst_27 = arith.constant dense<0.000000e+00> : vector<8x256xf32>
    %35 = tpu.matmul %34, %32, %cst_27 {dimension_numbers = #tpu.dot_dimension_numbers<[1], [0], [0], [1], [0, 0, 1, 1], [], []>} : vector<8x4xbf16>, vector<4x256xbf16>, vector<8x256xf32> -> vector<8x256xf32>
    %36 = arith.addf %29, %35 : vector<8x256xf32>
    %37 = vector.extract_strided_slice %31 {offsets = [0, 16], sizes = [4, 256], strides = [1, 1]} : vector<4x320xbf16> to vector<4x256xbf16>
    %c0_28 = arith.constant 0 : index
    %c6 = arith.constant 6 : index
    %c0_29 = arith.constant 0 : index
    %c0_30 = arith.constant 0 : index
    %38 = vector.load %arg4[%c0_28, %c6, %c0_29, %c0_30] : memref<1x25x8x4xbf16, #tpu.memory_space<vmem>>, vector<1x1x8x4xbf16>
    %39 = vector.shape_cast %38 : vector<1x1x8x4xbf16> to vector<8x4xbf16>
    %cst_31 = arith.constant dense<0.000000e+00> : vector<8x256xf32>
    %40 = tpu.matmul %39, %37, %cst_31 {dimension_numbers = #tpu.dot_dimension_numbers<[1], [0], [0], [1], [0, 0, 1, 1], [], []>} : vector<8x4xbf16>, vector<4x256xbf16>, vector<8x256xf32> -> vector<8x256xf32>
    %41 = arith.addf %36, %40 : vector<8x256xf32>
    %42 = vector.extract_strided_slice %31 {offsets = [0, 32], sizes = [4, 256], strides = [1, 1]} : vector<4x320xbf16> to vector<4x256xbf16>
    %c0_32 = arith.constant 0 : index
    %c11 = arith.constant 11 : index
    %c0_33 = arith.constant 0 : index
    %c0_34 = arith.constant 0 : index
    %43 = vector.load %arg4[%c0_32, %c11, %c0_33, %c0_34] : memref<1x25x8x4xbf16, #tpu.memory_space<vmem>>, vector<1x1x8x4xbf16>
    %44 = vector.shape_cast %43 : vector<1x1x8x4xbf16> to vector<8x4xbf16>
    %cst_35 = arith.constant dense<0.000000e+00> : vector<8x256xf32>
    %45 = tpu.matmul %44, %42, %cst_35 {dimension_numbers = #tpu.dot_dimension_numbers<[1], [0], [0], [1], [0, 0, 1, 1], [], []>} : vector<8x4xbf16>, vector<4x256xbf16>, vector<8x256xf32> -> vector<8x256xf32>
    %46 = arith.addf %41, %45 : vector<8x256xf32>
    %47 = vector.extract_strided_slice %31 {offsets = [0, 48], sizes = [4, 256], strides = [1, 1]} : vector<4x320xbf16> to vector<4x256xbf16>
    %c0_36 = arith.constant 0 : index
    %c16 = arith.constant 16 : index
    %c0_37 = arith.constant 0 : index
    %c0_38 = arith.constant 0 : index
    %48 = vector.load %arg4[%c0_36, %c16, %c0_37, %c0_38] : memref<1x25x8x4xbf16, #tpu.memory_space<vmem>>, vector<1x1x8x4xbf16>
    %49 = vector.shape_cast %48 : vector<1x1x8x4xbf16> to vector<8x4xbf16>
    %cst_39 = arith.constant dense<0.000000e+00> : vector<8x256xf32>
    %50 = tpu.matmul %49, %47, %cst_39 {dimension_numbers = #tpu.dot_dimension_numbers<[1], [0], [0], [1], [0, 0, 1, 1], [], []>} : vector<8x4xbf16>, vector<4x256xbf16>, vector<8x256xf32> -> vector<8x256xf32>
    %51 = arith.addf %46, %50 : vector<8x256xf32>
    %52 = vector.extract_strided_slice %31 {offsets = [0, 64], sizes = [4, 256], strides = [1, 1]} : vector<4x320xbf16> to vector<4x256xbf16>
    %c0_40 = arith.constant 0 : index
    %c21 = arith.constant 21 : index
    %c0_41 = arith.constant 0 : index
    %c0_42 = arith.constant 0 : index
    %53 = vector.load %arg4[%c0_40, %c21, %c0_41, %c0_42] : memref<1x25x8x4xbf16, #tpu.memory_space<vmem>>, vector<1x1x8x4xbf16>
    %54 = vector.shape_cast %53 : vector<1x1x8x4xbf16> to vector<8x4xbf16>
    %cst_43 = arith.constant dense<0.000000e+00> : vector<8x256xf32>
    %55 = tpu.matmul %54, %52, %cst_43 {dimension_numbers = #tpu.dot_dimension_numbers<[1], [0], [0], [1], [0, 0, 1, 1], [], []>} : vector<8x4xbf16>, vector<4x256xbf16>, vector<8x256xf32> -> vector<8x256xf32>
    %56 = arith.addf %51, %55 : vector<8x256xf32>
    %57 = vector.extract_strided_slice %1 {offsets = [0, 0, 2], sizes = [4, 20, 16], strides = [1, 1, 1]} : vector<4x20x20xbf16> to vector<4x20x16xbf16>
    %58 = vector.shape_cast %57 : vector<4x20x16xbf16> to vector<4x320xbf16>
    %59 = vector.extract_strided_slice %58 {offsets = [0, 0], sizes = [4, 256], strides = [1, 1]} : vector<4x320xbf16> to vector<4x256xbf16>
    %c0_44 = arith.constant 0 : index
    %c2 = arith.constant 2 : index
    %c0_45 = arith.constant 0 : index
    %c0_46 = arith.constant 0 : index
    %60 = vector.load %arg4[%c0_44, %c2, %c0_45, %c0_46] : memref<1x25x8x4xbf16, #tpu.memory_space<vmem>>, vector<1x1x8x4xbf16>
    %61 = vector.shape_cast %60 : vector<1x1x8x4xbf16> to vector<8x4xbf16>
    %cst_47 = arith.constant dense<0.000000e+00> : vector<8x256xf32>
    %62 = tpu.matmul %61, %59, %cst_47 {dimension_numbers = #tpu.dot_dimension_numbers<[1], [0], [0], [1], [0, 0, 1, 1], [], []>} : vector<8x4xbf16>, vector<4x256xbf16>, vector<8x256xf32> -> vector<8x256xf32>
    %63 = arith.addf %56, %62 : vector<8x256xf32>
    %64 = vector.extract_strided_slice %58 {offsets = [0, 16], sizes = [4, 256], strides = [1, 1]} : vector<4x320xbf16> to vector<4x256xbf16>
    %c0_48 = arith.constant 0 : index
    %c7 = arith.constant 7 : index
    %c0_49 = arith.constant 0 : index
    %c0_50 = arith.constant 0 : index
    %65 = vector.load %arg4[%c0_48, %c7, %c0_49, %c0_50] : memref<1x25x8x4xbf16, #tpu.memory_space<vmem>>, vector<1x1x8x4xbf16>
    %66 = vector.shape_cast %65 : vector<1x1x8x4xbf16> to vector<8x4xbf16>
    %cst_51 = arith.constant dense<0.000000e+00> : vector<8x256xf32>
    %67 = tpu.matmul %66, %64, %cst_51 {dimension_numbers = #tpu.dot_dimension_numbers<[1], [0], [0], [1], [0, 0, 1, 1], [], []>} : vector<8x4xbf16>, vector<4x256xbf16>, vector<8x256xf32> -> vector<8x256xf32>
    %68 = arith.addf %63, %67 : vector<8x256xf32>
    %69 = vector.extract_strided_slice %58 {offsets = [0, 32], sizes = [4, 256], strides = [1, 1]} : vector<4x320xbf16> to vector<4x256xbf16>
    %c0_52 = arith.constant 0 : index
    %c12 = arith.constant 12 : index
    %c0_53 = arith.constant 0 : index
    %c0_54 = arith.constant 0 : index
    %70 = vector.load %arg4[%c0_52, %c12, %c0_53, %c0_54] : memref<1x25x8x4xbf16, #tpu.memory_space<vmem>>, vector<1x1x8x4xbf16>
    %71 = vector.shape_cast %70 : vector<1x1x8x4xbf16> to vector<8x4xbf16>
    %cst_55 = arith.constant dense<0.000000e+00> : vector<8x256xf32>
    %72 = tpu.matmul %71, %69, %cst_55 {dimension_numbers = #tpu.dot_dimension_numbers<[1], [0], [0], [1], [0, 0, 1, 1], [], []>} : vector<8x4xbf16>, vector<4x256xbf16>, vector<8x256xf32> -> vector<8x256xf32>
    %73 = arith.addf %68, %72 : vector<8x256xf32>
    %74 = vector.extract_strided_slice %58 {offsets = [0, 48], sizes = [4, 256], strides = [1, 1]} : vector<4x320xbf16> to vector<4x256xbf16>
    %c0_56 = arith.constant 0 : index
    %c17 = arith.constant 17 : index
    %c0_57 = arith.constant 0 : index
    %c0_58 = arith.constant 0 : index
    %75 = vector.load %arg4[%c0_56, %c17, %c0_57, %c0_58] : memref<1x25x8x4xbf16, #tpu.memory_space<vmem>>, vector<1x1x8x4xbf16>
    %76 = vector.shape_cast %75 : vector<1x1x8x4xbf16> to vector<8x4xbf16>
    %cst_59 = arith.constant dense<0.000000e+00> : vector<8x256xf32>
    %77 = tpu.matmul %76, %74, %cst_59 {dimension_numbers = #tpu.dot_dimension_numbers<[1], [0], [0], [1], [0, 0, 1, 1], [], []>} : vector<8x4xbf16>, vector<4x256xbf16>, vector<8x256xf32> -> vector<8x256xf32>
    %78 = arith.addf %73, %77 : vector<8x256xf32>
    %79 = vector.extract_strided_slice %58 {offsets = [0, 64], sizes = [4, 256], strides = [1, 1]} : vector<4x320xbf16> to vector<4x256xbf16>
    %c0_60 = arith.constant 0 : index
    %c22 = arith.constant 22 : index
    %c0_61 = arith.constant 0 : index
    %c0_62 = arith.constant 0 : index
    %80 = vector.load %arg4[%c0_60, %c22, %c0_61, %c0_62] : memref<1x25x8x4xbf16, #tpu.memory_space<vmem>>, vector<1x1x8x4xbf16>
    %81 = vector.shape_cast %80 : vector<1x1x8x4xbf16> to vector<8x4xbf16>
    %cst_63 = arith.constant dense<0.000000e+00> : vector<8x256xf32>
    %82 = tpu.matmul %81, %79, %cst_63 {dimension_numbers = #tpu.dot_dimension_numbers<[1], [0], [0], [1], [0, 0, 1, 1], [], []>} : vector<8x4xbf16>, vector<4x256xbf16>, vector<8x256xf32> -> vector<8x256xf32>
    %83 = arith.addf %78, %82 : vector<8x256xf32>
    %84 = vector.extract_strided_slice %1 {offsets = [0, 0, 3], sizes = [4, 20, 16], strides = [1, 1, 1]} : vector<4x20x20xbf16> to vector<4x20x16xbf16>
    %85 = vector.shape_cast %84 : vector<4x20x16xbf16> to vector<4x320xbf16>
    %86 = vector.extract_strided_slice %85 {offsets = [0, 0], sizes = [4, 256], strides = [1, 1]} : vector<4x320xbf16> to vector<4x256xbf16>
    %c0_64 = arith.constant 0 : index
    %c3 = arith.constant 3 : index
    %c0_65 = arith.constant 0 : index
    %c0_66 = arith.constant 0 : index
    %87 = vector.load %arg4[%c0_64, %c3, %c0_65, %c0_66] : memref<1x25x8x4xbf16, #tpu.memory_space<vmem>>, vector<1x1x8x4xbf16>
    %88 = vector.shape_cast %87 : vector<1x1x8x4xbf16> to vector<8x4xbf16>
    %cst_67 = arith.constant dense<0.000000e+00> : vector<8x256xf32>
    %89 = tpu.matmul %88, %86, %cst_67 {dimension_numbers = #tpu.dot_dimension_numbers<[1], [0], [0], [1], [0, 0, 1, 1], [], []>} : vector<8x4xbf16>, vector<4x256xbf16>, vector<8x256xf32> -> vector<8x256xf32>
    %90 = arith.addf %83, %89 : vector<8x256xf32>
    %91 = vector.extract_strided_slice %85 {offsets = [0, 16], sizes = [4, 256], strides = [1, 1]} : vector<4x320xbf16> to vector<4x256xbf16>
    %c0_68 = arith.constant 0 : index
    %c8 = arith.constant 8 : index
    %c0_69 = arith.constant 0 : index
    %c0_70 = arith.constant 0 : index
    %92 = vector.load %arg4[%c0_68, %c8, %c0_69, %c0_70] : memref<1x25x8x4xbf16, #tpu.memory_space<vmem>>, vector<1x1x8x4xbf16>
    %93 = vector.shape_cast %92 : vector<1x1x8x4xbf16> to vector<8x4xbf16>
    %cst_71 = arith.constant dense<0.000000e+00> : vector<8x256xf32>
    %94 = tpu.matmul %93, %91, %cst_71 {dimension_numbers = #tpu.dot_dimension_numbers<[1], [0], [0], [1], [0, 0, 1, 1], [], []>} : vector<8x4xbf16>, vector<4x256xbf16>, vector<8x256xf32> -> vector<8x256xf32>
    %95 = arith.addf %90, %94 : vector<8x256xf32>
    %96 = vector.extract_strided_slice %85 {offsets = [0, 32], sizes = [4, 256], strides = [1, 1]} : vector<4x320xbf16> to vector<4x256xbf16>
    %c0_72 = arith.constant 0 : index
    %c13 = arith.constant 13 : index
    %c0_73 = arith.constant 0 : index
    %c0_74 = arith.constant 0 : index
    %97 = vector.load %arg4[%c0_72, %c13, %c0_73, %c0_74] : memref<1x25x8x4xbf16, #tpu.memory_space<vmem>>, vector<1x1x8x4xbf16>
    %98 = vector.shape_cast %97 : vector<1x1x8x4xbf16> to vector<8x4xbf16>
    %cst_75 = arith.constant dense<0.000000e+00> : vector<8x256xf32>
    %99 = tpu.matmul %98, %96, %cst_75 {dimension_numbers = #tpu.dot_dimension_numbers<[1], [0], [0], [1], [0, 0, 1, 1], [], []>} : vector<8x4xbf16>, vector<4x256xbf16>, vector<8x256xf32> -> vector<8x256xf32>
    %100 = arith.addf %95, %99 : vector<8x256xf32>
    %101 = vector.extract_strided_slice %85 {offsets = [0, 48], sizes = [4, 256], strides = [1, 1]} : vector<4x320xbf16> to vector<4x256xbf16>
    %c0_76 = arith.constant 0 : index
    %c18 = arith.constant 18 : index
    %c0_77 = arith.constant 0 : index
    %c0_78 = arith.constant 0 : index
    %102 = vector.load %arg4[%c0_76, %c18, %c0_77, %c0_78] : memref<1x25x8x4xbf16, #tpu.memory_space<vmem>>, vector<1x1x8x4xbf16>
    %103 = vector.shape_cast %102 : vector<1x1x8x4xbf16> to vector<8x4xbf16>
    %cst_79 = arith.constant dense<0.000000e+00> : vector<8x256xf32>
    %104 = tpu.matmul %103, %101, %cst_79 {dimension_numbers = #tpu.dot_dimension_numbers<[1], [0], [0], [1], [0, 0, 1, 1], [], []>} : vector<8x4xbf16>, vector<4x256xbf16>, vector<8x256xf32> -> vector<8x256xf32>
    %105 = arith.addf %100, %104 : vector<8x256xf32>
    %106 = vector.extract_strided_slice %85 {offsets = [0, 64], sizes = [4, 256], strides = [1, 1]} : vector<4x320xbf16> to vector<4x256xbf16>
    %c0_80 = arith.constant 0 : index
    %c23 = arith.constant 23 : index
    %c0_81 = arith.constant 0 : index
    %c0_82 = arith.constant 0 : index
    %107 = vector.load %arg4[%c0_80, %c23, %c0_81, %c0_82] : memref<1x25x8x4xbf16, #tpu.memory_space<vmem>>, vector<1x1x8x4xbf16>
    %108 = vector.shape_cast %107 : vector<1x1x8x4xbf16> to vector<8x4xbf16>
    %cst_83 = arith.constant dense<0.000000e+00> : vector<8x256xf32>
    %109 = tpu.matmul %108, %106, %cst_83 {dimension_numbers = #tpu.dot_dimension_numbers<[1], [0], [0], [1], [0, 0, 1, 1], [], []>} : vector<8x4xbf16>, vector<4x256xbf16>, vector<8x256xf32> -> vector<8x256xf32>
    %110 = arith.addf %105, %109 : vector<8x256xf32>
    %111 = vector.extract_strided_slice %1 {offsets = [0, 0, 4], sizes = [4, 20, 16], strides = [1, 1, 1]} : vector<4x20x20xbf16> to vector<4x20x16xbf16>
    %112 = vector.shape_cast %111 : vector<4x20x16xbf16> to vector<4x320xbf16>
    %113 = vector.extract_strided_slice %112 {offsets = [0, 0], sizes = [4, 256], strides = [1, 1]} : vector<4x320xbf16> to vector<4x256xbf16>
    %c0_84 = arith.constant 0 : index
    %c4 = arith.constant 4 : index
    %c0_85 = arith.constant 0 : index
    %c0_86 = arith.constant 0 : index
    %114 = vector.load %arg4[%c0_84, %c4, %c0_85, %c0_86] : memref<1x25x8x4xbf16, #tpu.memory_space<vmem>>, vector<1x1x8x4xbf16>
    %115 = vector.shape_cast %114 : vector<1x1x8x4xbf16> to vector<8x4xbf16>
    %cst_87 = arith.constant dense<0.000000e+00> : vector<8x256xf32>
    %116 = tpu.matmul %115, %113, %cst_87 {dimension_numbers = #tpu.dot_dimension_numbers<[1], [0], [0], [1], [0, 0, 1, 1], [], []>} : vector<8x4xbf16>, vector<4x256xbf16>, vector<8x256xf32> -> vector<8x256xf32>
    %117 = arith.addf %110, %116 : vector<8x256xf32>
    %118 = vector.extract_strided_slice %112 {offsets = [0, 16], sizes = [4, 256], strides = [1, 1]} : vector<4x320xbf16> to vector<4x256xbf16>
    %c0_88 = arith.constant 0 : index
    %c9 = arith.constant 9 : index
    %c0_89 = arith.constant 0 : index
    %c0_90 = arith.constant 0 : index
    %119 = vector.load %arg4[%c0_88, %c9, %c0_89, %c0_90] : memref<1x25x8x4xbf16, #tpu.memory_space<vmem>>, vector<1x1x8x4xbf16>
    %120 = vector.shape_cast %119 : vector<1x1x8x4xbf16> to vector<8x4xbf16>
    %cst_91 = arith.constant dense<0.000000e+00> : vector<8x256xf32>
    %121 = tpu.matmul %120, %118, %cst_91 {dimension_numbers = #tpu.dot_dimension_numbers<[1], [0], [0], [1], [0, 0, 1, 1], [], []>} : vector<8x4xbf16>, vector<4x256xbf16>, vector<8x256xf32> -> vector<8x256xf32>
    %122 = arith.addf %117, %121 : vector<8x256xf32>
    %123 = vector.extract_strided_slice %112 {offsets = [0, 32], sizes = [4, 256], strides = [1, 1]} : vector<4x320xbf16> to vector<4x256xbf16>
    %c0_92 = arith.constant 0 : index
    %c14 = arith.constant 14 : index
    %c0_93 = arith.constant 0 : index
    %c0_94 = arith.constant 0 : index
    %124 = vector.load %arg4[%c0_92, %c14, %c0_93, %c0_94] : memref<1x25x8x4xbf16, #tpu.memory_space<vmem>>, vector<1x1x8x4xbf16>
    %125 = vector.shape_cast %124 : vector<1x1x8x4xbf16> to vector<8x4xbf16>
    %cst_95 = arith.constant dense<0.000000e+00> : vector<8x256xf32>
    %126 = tpu.matmul %125, %123, %cst_95 {dimension_numbers = #tpu.dot_dimension_numbers<[1], [0], [0], [1], [0, 0, 1, 1], [], []>} : vector<8x4xbf16>, vector<4x256xbf16>, vector<8x256xf32> -> vector<8x256xf32>
    %127 = arith.addf %122, %126 : vector<8x256xf32>
    %128 = vector.extract_strided_slice %112 {offsets = [0, 48], sizes = [4, 256], strides = [1, 1]} : vector<4x320xbf16> to vector<4x256xbf16>
    %c0_96 = arith.constant 0 : index
    %c19 = arith.constant 19 : index
    %c0_97 = arith.constant 0 : index
    %c0_98 = arith.constant 0 : index
    %129 = vector.load %arg4[%c0_96, %c19, %c0_97, %c0_98] : memref<1x25x8x4xbf16, #tpu.memory_space<vmem>>, vector<1x1x8x4xbf16>
    %130 = vector.shape_cast %129 : vector<1x1x8x4xbf16> to vector<8x4xbf16>
    %cst_99 = arith.constant dense<0.000000e+00> : vector<8x256xf32>
    %131 = tpu.matmul %130, %128, %cst_99 {dimension_numbers = #tpu.dot_dimension_numbers<[1], [0], [0], [1], [0, 0, 1, 1], [], []>} : vector<8x4xbf16>, vector<4x256xbf16>, vector<8x256xf32> -> vector<8x256xf32>
    %132 = arith.addf %127, %131 : vector<8x256xf32>
    %133 = vector.extract_strided_slice %112 {offsets = [0, 64], sizes = [4, 256], strides = [1, 1]} : vector<4x320xbf16> to vector<4x256xbf16>
    %c0_100 = arith.constant 0 : index
    %c24 = arith.constant 24 : index
    %c0_101 = arith.constant 0 : index
    %c0_102 = arith.constant 0 : index
    %134 = vector.load %arg4[%c0_100, %c24, %c0_101, %c0_102] : memref<1x25x8x4xbf16, #tpu.memory_space<vmem>>, vector<1x1x8x4xbf16>
    %135 = vector.shape_cast %134 : vector<1x1x8x4xbf16> to vector<8x4xbf16>
    %cst_103 = arith.constant dense<0.000000e+00> : vector<8x256xf32>
    %136 = tpu.matmul %135, %133, %cst_103 {dimension_numbers = #tpu.dot_dimension_numbers<[1], [0], [0], [1], [0, 0, 1, 1], [], []>} : vector<8x4xbf16>, vector<4x256xbf16>, vector<8x256xf32> -> vector<8x256xf32>
    %137 = arith.addf %132, %136 : vector<8x256xf32>
    %c0_104 = arith.constant 0 : index
    %c0_105 = arith.constant 0 : index
    %c0_106 = arith.constant 0 : index
    %138 = vector.load %arg5[%c0_104, %c0_105, %c0_106] : memref<1x8x1xf32, #tpu.memory_space<vmem>>, vector<1x8x1xf32>
    %139 = vector.shape_cast %138 : vector<1x8x1xf32> to vector<8x1xf32>
    %140 = vector.broadcast %139 : vector<8x1xf32> to vector<8x256xf32>
    %141 = arith.addf %137, %140 : vector<8x256xf32>
    %c0_107 = arith.constant 0 : index
    %c0_108 = arith.constant 0 : index
    %c0_109 = arith.constant 0 : index
    %142 = vector.load %arg6[%c0_107, %c0_108, %c0_109] : memref<1x8x256xf32, #tpu.memory_space<vmem>>, vector<1x8x256xf32>
    %143 = vector.shape_cast %142 : vector<1x8x256xf32> to vector<8x256xf32>
    %144 = vector.shape_cast %141 : vector<8x256xf32> to vector<1x8x256xf32>
    tpu.vector_store %arg6[%c0_107, %c0_108, %c0_109], %144 {strides = array<i32>} : memref<1x8x256xf32, #tpu.memory_space<vmem>>, vector<1x8x256xf32>,
    return
  }
  func.func @transform_0(%arg0: i32, %arg1: i32, %arg2: memref<2xi32, #tpu.memory_space<smem>>) -> (i32, i32, i32, i32) {
    %c0_i32 = arith.constant 0 : i32
    %c0_i32_0 = arith.constant 0 : i32
    %c0_i32_1 = arith.constant 0 : i32
    %c0_i32_2 = arith.constant 0 : i32
    return %arg0, %c0_i32, %c0_i32_0, %c0_i32_1 : i32, i32, i32, i32
  }
  func.func @transform_1(%arg0: i32, %arg1: i32, %arg2: memref<2xi32, #tpu.memory_space<smem>>) -> (i32, i32, i32, i32) {
    %0 = arith.index_cast %arg0 : i32 to index
    %1 = memref.load %arg2[%0] : memref<2xi32, #tpu.memory_space<smem>>
    %c0_i32 = arith.constant 0 : i32
    %c0_i32_0 = arith.constant 0 : i32
    %c0_i32_1 = arith.constant 0 : i32
    %c0_i32_2 = arith.constant 0 : i32
    return %1, %c0_i32, %c0_i32_0, %c0_i32_1 : i32, i32, i32, i32
  }
  func.func @transform_2(%arg0: i32, %arg1: i32, %arg2: memref<2xi32, #tpu.memory_space<smem>>) -> (i32, i32, i32) {
    %0 = arith.index_cast %arg0 : i32 to index
    %1 = memref.load %arg2[%0] : memref<2xi32, #tpu.memory_space<smem>>
    %c0_i32 = arith.constant 0 : i32
    %c0_i32_0 = arith.constant 0 : i32
    %c0_i32_1 = arith.constant 0 : i32
    return %1, %c0_i32, %c0_i32_0 : i32, i32, i32
  }
  func.func @transform_3(%arg0: i32, %arg1: i32, %arg2: memref<2xi32, #tpu.memory_space<smem>>) -> (i32, i32, i32) {
    %c0_i32 = arith.constant 0 : i32
    %c0_i32_0 = arith.constant 0 : i32
    return %arg0, %c0_i32, %arg1 : i32, i32, i32
  }
}

</mosaic_0001>

<llo_original>
// kernel: mixed_layer_forward.1
$region0: #{mixed_layer_forward.1}
  #allocation0 [shape = 'u32[]', space=smem, size = 0x4, offset = 0x4, fixed_abs, tag = 'smem constant byte address 0x4 - core index']
  #allocation1 [shape = 'u32[72,128]{1,0:T(1,128)}', space=vmem, size = 0x9000, scoped, tag = 'internal scratch']
  #allocation2 [shape = 's32[1]{0}', space=sflag, size = 0x4, scoped, tag = 'scoped memory for mixed_layer_forward.1']
  #allocation3 [shape = 'u8[512]{0}', space=smem, size = 0x200, scoped, tag = 'prefetched SMEM operand 0']
  %s0 = inlined_call_operand.vmem [shape: s32[2], index: 0, kind: input, shape index: {}]
  %s1 = inlined_call_operand.vmem [shape: bf16[2,4,20,20], index: 1, kind: input, shape index: {}]
  %s2 = inlined_call_operand.vmem [shape: bf16[3,25,8,4], index: 2, kind: input, shape index: {}]
  %s3 = inlined_call_operand.vmem [shape: f32[3,8,1], index: 3, kind: input, shape index: {}]
  %s4 = inlined_call_operand.vmem [shape: f32[2,8,256], index: 4, kind: output, shape index: {}]
  %s5 = sld [smem:[#allocation0]]
  $region45: #{mixed_layer_forward.1} parent=0
    _
  %s7 = ssub.s32 1, %s5
  %s8 = scalar_select 0, %s7, %s5
  %s10 = sshll.u32 %s0, 4
  %s11 = int_to_ptr.vmem [resolvable:$true] %s10
  %13 = dma.vmem_to_smem %s11, 16, [#allocation3], [#allocation2]
  %15 = dma.done [#allocation2], 16
  %16 = sfence
  loop: start=0, step=1, limit=4
  $region2: #{mixed_layer_forward.1} parent=0 // loop_pre_header
    _
  $region3: #{mixed_layer_forward.1} parent=0 // loop_header
    %s18 = sphi 0, %s22
    %p19 = scmp.ge.s32.totalorder %s18, 4
    %s25 = sphi 0, %s37
    %s26 = sphi 0, %s33
    %s27 = sphi 0, %s25
    %s28 = sphi 0, %s26
    %s29 = sphi 0, %s27
    %s30 = sphi 0, %s28
    %s40 = sphi 0, %s42
    %s43 = sphi 0, %s40
    %s44 = sphi 0, %s43
    %s60 = sphi 0, %s44
    %s68 = sphi 0, %s70
    %s71 = sphi 0, %s68
    %s72 = sphi 0, %s71
    %s88 = sphi 0, %s72
    %s96 = sphi 0, %s98
    %s99 = sphi 0, %s96
    %s100 = sphi 0, %s99
    %s116 = sphi 0, %s100
    %s124 = sphi 0, %s126
    %s127 = sphi 0, %s124
    %s128 = sphi 0, %s127
    %s144 = sphi 0, %s128
  $region4: #{mixed_layer_forward.1} parent=0 // loop_header_branch
    %21 = sbr.rel (%p19) target = $region8
  $region5: #{mixed_layer_forward.1} parent=0 // loop_body
    %s23 = ssub.s32 %s18, 1
    %s24 = ssub.s32 %s18, 2
    %s31 = sadd.s32 1, %s26
    %p32 = scmp.ge.s32.totalorder %s31, 1
    %s33 = scalar_select %p32, 0, %s31
    %s34 = sadd.s32 1, %s25
    %s35 = scalar_select %p32, %s34, %s25
    %p36 = scmp.ge.s32.totalorder %s35, 2
    %s37 = scalar_select %p36, 0, %s35
    %s38 = ssub.s32 %s25, %s37
    %p39 = scmp.eq.s32.totalorder %s38, 0
    %s41 = sadd.s32 %s40, 1
    %s42 = scalar_select %p39, %s40, %s41
    %p45 = pneg %p39
    %p46 = scmp.eq.s32.totalorder %s18, 1
    %p47 = por %p45, %p46
    %p48 = scmp.ne.s32.totalorder %s40, %s43
    %p49 = scmp.eq.s32.totalorder %s18, 0
    %p50 = por %p48, %p49
    %p51 = scmp.ne.s32.totalorder %s40, %s43
    %p52 = scmp.eq.s32.totalorder %s23, 1
    %p53 = por %p51, %p52
    %p54 = scmp.ne.s32.totalorder %s43, %s44
    %p55 = scmp.eq.s32.totalorder %s23, 0
    %p56 = por %p54, %p55
    %p57 = scmp.ne.s32.totalorder %s43, %s44
    %p58 = scmp.eq.s32.totalorder %s24, 1
    %p59 = por %p57, %p58
    %p61 = scmp.ne.s32.totalorder %s44, %s60
    %p62 = scmp.eq.s32.totalorder %s24, 0
    %p63 = por %p61, %p62
    %s64 = sld [smem:[#allocation3 + %s25]]
    %s65 = sld [smem:[#allocation3 + %s37]]
    %s66 = ssub.s32 %s64, %s65
    %p67 = scmp.eq.s32.totalorder %s66, 0
    %s69 = sadd.s32 %s68, 1
    %s70 = scalar_select %p67, %s68, %s69
    %p73 = pneg %p67
    %p74 = scmp.eq.s32.totalorder %s18, 1
    %p75 = por %p73, %p74
    %p76 = scmp.ne.s32.totalorder %s68, %s71
    %p77 = scmp.eq.s32.totalorder %s18, 0
    %p78 = por %p76, %p77
    %p79 = scmp.ne.s32.totalorder %s68, %s71
    %p80 = scmp.eq.s32.totalorder %s23, 1
    %p81 = por %p79, %p80
    %p82 = scmp.ne.s32.totalorder %s71, %s72
    %p83 = scmp.eq.s32.totalorder %s23, 0
    %p84 = por %p82, %p83
    %p85 = scmp.ne.s32.totalorder %s71, %s72
    %p86 = scmp.eq.s32.totalorder %s24, 1
    %p87 = por %p85, %p86
    %p89 = scmp.ne.s32.totalorder %s72, %s88
    %p90 = scmp.eq.s32.totalorder %s24, 0
    %p91 = por %p89, %p90
    %s92 = sld [smem:[#allocation3 + %s25]]
    %s93 = sld [smem:[#allocation3 + %s37]]
    %s94 = ssub.s32 %s92, %s93
    %p95 = scmp.eq.s32.totalorder %s94, 0
    %s97 = sadd.s32 %s96, 1
    %s98 = scalar_select %p95, %s96, %s97
    %p101 = pneg %p95
    %p102 = scmp.eq.s32.totalorder %s18, 1
    %p103 = por %p101, %p102
    %p104 = scmp.ne.s32.totalorder %s96, %s99
    %p105 = scmp.eq.s32.totalorder %s18, 0
    %p106 = por %p104, %p105
    %p107 = scmp.ne.s32.totalorder %s96, %s99
    %p108 = scmp.eq.s32.totalorder %s23, 1
    %p109 = por %p107, %p108
    %p110 = scmp.ne.s32.totalorder %s99, %s100
    %p111 = scmp.eq.s32.totalorder %s23, 0
    %p112 = por %p110, %p111
    %p113 = scmp.ne.s32.totalorder %s99, %s100
    %p114 = scmp.eq.s32.totalorder %s24, 1
    %p115 = por %p113, %p114
    %p117 = scmp.ne.s32.totalorder %s100, %s116
    %p118 = scmp.eq.s32.totalorder %s24, 0
    %p119 = por %p117, %p118
    %s120 = ssub.s32 %s25, %s37
    %s121 = ssub.s32 %s26, %s33
    %s122 = sor.u32 %s120, %s121
    %p123 = scmp.eq.s32.totalorder %s122, 0
    %s125 = sadd.s32 %s124, 1
    %s126 = scalar_select %p123, %s124, %s125
    %p129 = pneg %p123
    %p130 = scmp.eq.s32.totalorder %s18, 1
    %p131 = por %p129, %p130
    %p132 = scmp.ne.s32.totalorder %s124, %s127
    %p133 = scmp.eq.s32.totalorder %s18, 0
    %p134 = por %p132, %p133
    %p135 = scmp.ne.s32.totalorder %s124, %s127
    %p136 = scmp.eq.s32.totalorder %s23, 1
    %p137 = por %p135, %p136
    %p138 = scmp.ne.s32.totalorder %s127, %s128
    %p139 = scmp.eq.s32.totalorder %s23, 0
    %p140 = por %p138, %p139
    %p141 = scmp.ne.s32.totalorder %s127, %s128
    %p142 = scmp.eq.s32.totalorder %s24, 1
    %p143 = por %p141, %p142
    %p145 = scmp.ne.s32.totalorder %s128, %s144
    %p146 = scmp.eq.s32.totalorder %s24, 0
    %p147 = por %p145, %p146
    %p148 = scmp.le.s32.totalorder 1, %s18
    %p149 = scmp.lt.s32.totalorder %s18, 3
    %p150 = pnand %p148, %p149
    %p151 = pneg %p150
    // Predicated region
    $region9: #{mixed_layer_forward.1} parent=5 // pred_check
      _
    $region10: #{mixed_layer_forward.1} parent=5 // pred_check_branch
      %153 = sbr.rel (%p150) target = $region12
    $region11: #{mixed_layer_forward.1} parent=5 // pred_region
      %s154 = ssub.s32 %s18, 1
    $region12: #{mixed_layer_forward.1} parent=5 // pred_fallthru
      _
    %p155 = scmp.lt.s32.totalorder %s18, 2
    // Predicated region
    $region13: #{mixed_layer_forward.1} parent=5 // pred_check
      %p156 = pneg %p155
    $region14: #{mixed_layer_forward.1} parent=5 // pred_check_branch
      %158 = sbr.rel (%p156) target = $region16
    $region15: #{mixed_layer_forward.1} parent=5 // pred_region
      // Predicated region
      $region17: #{mixed_layer_forward.1} parent=15 // pred_check
        %p159 = pneg %p50
      $region18: #{mixed_layer_forward.1} parent=15 // pred_check_branch
        %161 = sbr.rel (%p159) target = $region20
      $region19: #{mixed_layer_forward.1} parent=15 // pred_region
        %p162 = scmp.lt.s32.totalorder %s25, 1
        %s163 = scalar_select %p162, %s25, 1
        %s164 = smul.addr %s163, 12
        %s165 = smul.addr %s164, 4
        %s166 = scalar_lea.vmem %s1, %s165
      $region20: #{mixed_layer_forward.1} parent=15 // pred_fallthru
        _
      // Predicated region
      $region21: #{mixed_layer_forward.1} parent=15 // pred_check
        %p167 = pneg %p78
      $region22: #{mixed_layer_forward.1} parent=15 // pred_check_branch
        %169 = sbr.rel (%p167) target = $region24
      $region23: #{mixed_layer_forward.1} parent=15 // pred_region
        %s170 = sld [smem:[#allocation3 + %s25]]
        %p171 = scmp.lt.s32.totalorder %s170, 2
        %s172 = scalar_select %p171, %s170, 2
        %s173 = smul.addr %s172, 25
        %s174 = smul.addr %s173, 4
        %s175 = scalar_lea.vmem %s2, %s174
        %s176 = sld [smem:[#allocation3 + %s25]]
      $region24: #{mixed_layer_forward.1} parent=15 // pred_fallthru
        _
      // Predicated region
      $region25: #{mixed_layer_forward.1} parent=15 // pred_check
        %p177 = pneg %p106
      $region26: #{mixed_layer_forward.1} parent=15 // pred_check_branch
        %179 = sbr.rel (%p177) target = $region28
      $region27: #{mixed_layer_forward.1} parent=15 // pred_region
        %s180 = sld [smem:[#allocation3 + %s25]]
        %p181 = scmp.lt.s32.totalorder %s180, 2
        %s182 = scalar_select %p181, %s180, 2
        %s183 = smul.addr %s182, 8
        %s184 = scalar_lea.vmem %s3, %s183
        %s185 = sld [smem:[#allocation3 + %s25]]
      $region28: #{mixed_layer_forward.1} parent=15 // pred_fallthru
        _
    $region16: #{mixed_layer_forward.1} parent=5 // pred_fallthru
      _
    %p186 = scmp.le.s32.totalorder 1, %s18
    %p187 = scmp.lt.s32.totalorder %s18, 3
    %p188 = pnand %p186, %p187
    %p189 = pneg %p188
    // Predicated region
    $region29: #{mixed_layer_forward.1} parent=5 // pred_check
      _
    $region30: #{mixed_layer_forward.1} parent=5 // pred_check_branch
      %191 = sbr.rel (%p188) target = $region32
    $region31: #{mixed_layer_forward.1} parent=5 // pred_region
      %s192 = ssub.s32 %s18, 1
      %p193 = scmp.lt.s32.totalorder %s27, 1
      %s194 = scalar_select %p193, %s27, 1
      %s195 = smul.addr %s194, 12
      %s196 = smul.addr %s195, 4
      %s197 = scalar_lea.vmem %s1, %s196
      %p198 = pneg %p56
      %p199 = pneg %p53
      %s200 = sld [smem:[#allocation3 + %s27]]
      %p201 = scmp.lt.s32.totalorder %s200, 2
      %s202 = scalar_select %p201, %s200, 2
      %s203 = smul.addr %s202, 25
      %s204 = smul.addr %s203, 4
      %s205 = scalar_lea.vmem %s2, %s204
      %p206 = pneg %p84
      %p207 = pneg %p81
      %s208 = sld [smem:[#allocation3 + %s27]]
      %p209 = scmp.lt.s32.totalorder %s208, 2
      %s210 = scalar_select %p209, %s208, 2
      %s211 = smul.addr %s210, 8
      %s212 = scalar_lea.vmem %s3, %s211
      %p213 = pneg %p112
      %p214 = pneg %p109
      %p215 = pneg %p140
      %p216 = pneg %p137
      %s217 = smul.u32 2, %s28
      %p218 = scmp.lt.s32.totalorder %s27, 1
      %s219 = scalar_select %p218, %s27, 1
      %p220 = scmp.lt.s32.totalorder %s217, 1
      %s221 = scalar_select %p220, %s217, 1
      %s222 = smul.addr %s219, 2
      %s223 = sadd.s32 %s221, %s222
      %s224 = smul.addr %s223, 8
      %s225 = scalar_lea.vmem %s4, %s224
      %p226 = scmp.lt.s32.totalorder %s27, 1
      %s227 = scalar_select %p226, %s27, 1
      %s228 = smul.addr %s227, 12
      %s229 = smul.addr %s228, 4
      %s230 = scalar_lea.vmem %s1, %s229
      %s231 = sld [smem:[#allocation3 + %s27]]
      %p232 = scmp.lt.s32.totalorder %s231, 2
      %s233 = scalar_select %p232, %s231, 2
      %s234 = smul.addr %s233, 25
      %s235 = smul.addr %s234, 4
      %s236 = scalar_lea.vmem %s2, %s235
      %s237 = sld [smem:[#allocation3 + %s27]]
      %s238 = sld [smem:[#allocation3 + %s27]]
      %p239 = scmp.lt.s32.totalorder %s238, 2
      %s240 = scalar_select %p239, %s238, 2
      %s241 = smul.addr %s240, 8
      %s242 = scalar_lea.vmem %s3, %s241
      %s243 = sld [smem:[#allocation3 + %s27]]
      %s244 = smul.u32 2, %s28
      %p245 = scmp.lt.s32.totalorder %s27, 1
      %s246 = scalar_select %p245, %s27, 1
      %p247 = scmp.lt.s32.totalorder %s244, 1
      %s248 = scalar_select %p247, %s244, 1
      %s249 = smul.addr %s246, 2
      %s250 = sadd.s32 %s248, %s249
      %s251 = smul.addr %s250, 8
      %s252 = scalar_lea.vmem %s4, %s251
      %s253 = smul.u32 2, %s28
      %v255 = vld [vmem:[%s230] sm:$0xf]
      %v256 = vld [vmem:[%s230 + $0x4] sm:$0xf]
      %v257 = vld [vmem:[%s230 + $0x8] sm:$0x3]
      %v258 = vld [vmem:[%s230 + $0xc] sm:$0xf]
      %v259 = vld [vmem:[%s230 + $0x10] sm:$0xf]
      %v260 = vld [vmem:[%s230 + $0x14] sm:$0x3]
      %v261 = vld [vmem:[%s230 + $0x18] sm:$0xf]
      %v262 = vld [vmem:[%s230 + $0x1c] sm:$0xf]
      %v263 = vld [vmem:[%s230 + $0x20] sm:$0x3]
      %v264 = vld [vmem:[%s230 + $0x24] sm:$0xf]
      %v265 = vld [vmem:[%s230 + $0x28] sm:$0xf]
      %v266 = vld [vmem:[%s230 + $0x2c] sm:$0x3]
      %v268 = vunpack.c.l.s4 1983009808
      %v269 = vunpack.c.0.s8 %v268
      %v270 = vperm.slane %v255, %v269
      %v272 = vunpack.c.l.s4 1983009808
      %v273 = vunpack.c.0.s8 %v272
      %v274 = vperm.slane %v261, %v273
      %v275 = vrot.slane %v274, 4
      %vm276 = vcmask 1047556
      %v277 = vsel %vm276, %v275, %v270
      %v278 = vrot.slane %v270, 4
      %v279 = vsel %vm276, %v274, %v278
      %v281 = vunpack.c.l.s4 1934713408
      %v282 = vunpack.c.0.s8 %v281
      %v283 = vperm.slane %v277, %v282
      %v285 = vunpack.c.l.s4 1934713408
      %v286 = vunpack.c.0.s8 %v285
      %v287 = vperm.slane %v279, %v286
      %v288 = vrot.slane %v283, 4
      %v289 = vsel %vm276, 0, %v288
      %v290 = vrot.slane %v287, 4
      %v291 = vsel %vm276, 0, %v290
      %v293 = vunpack.c.l.s4 1983009808
      %v294 = vunpack.c.0.s8 %v293
      %v295 = vperm.slane %v258, %v294
      %v297 = vunpack.c.l.s4 1983009808
      %v298 = vunpack.c.0.s8 %v297
      %v299 = vperm.slane %v264, %v298
      %v300 = vrot.slane %v299, 4
      %v301 = vsel %vm276, %v300, %v295
      %v302 = vrot.slane %v295, 4
      %v303 = vsel %vm276, %v299, %v302
      %v305 = vunpack.c.l.s4 1934713408
      %v306 = vunpack.c.0.s8 %v305
      %v307 = vperm.slane %v301, %v306
      %v309 = vunpack.c.l.s4 1934713408
      %v310 = vunpack.c.0.s8 %v309
      %v311 = vperm.slane %v303, %v310
      %v312 = vrot.slane %v307, 4
      %v313 = vsel %vm276, 0, %v312
      %v314 = vrot.slane %v311, 4
      %v315 = vsel %vm276, 0, %v314
      %v317 = vunpack.c.l.s4 1983009808
      %v318 = vunpack.c.0.s8 %v317
      %v319 = vperm.slane %v256, %v318
      %v321 = vunpack.c.l.s4 1983009808
      %v322 = vunpack.c.0.s8 %v321
      %v323 = vperm.slane %v262, %v322
      %v324 = vrot.slane %v323, 4
      %v325 = vsel %vm276, %v324, %v319
      %v326 = vrot.slane %v319, 4
      %v327 = vsel %vm276, %v323, %v326
      %v329 = vunpack.c.l.s4 1934713408
      %v330 = vunpack.c.0.s8 %v329
      %v331 = vperm.slane %v325, %v330
      %v333 = vunpack.c.l.s4 1934713408
      %v334 = vunpack.c.0.s8 %v333
      %v335 = vperm.slane %v327, %v334
      %v336 = vrot.slane %v331, 4
      %v337 = vsel %vm276, 0, %v336
      %v338 = vrot.slane %v335, 4
      %v339 = vsel %vm276, 0, %v338
      %v341 = vunpack.c.l.s4 1983009808
      %v342 = vunpack.c.0.s8 %v341
      %v343 = vperm.slane %v259, %v342
      %v345 = vunpack.c.l.s4 1983009808
      %v346 = vunpack.c.0.s8 %v345
      %v347 = vperm.slane %v265, %v346
      %v348 = vrot.slane %v347, 4
      %v349 = vsel %vm276, %v348, %v343
      %v350 = vrot.slane %v343, 4
      %v351 = vsel %vm276, %v347, %v350
      %v353 = vunpack.c.l.s4 1934713408
      %v354 = vunpack.c.0.s8 %v353
      %v355 = vperm.slane %v349, %v354
      %v357 = vunpack.c.l.s4 1934713408
      %v358 = vunpack.c.0.s8 %v357
      %v359 = vperm.slane %v351, %v358
      %v360 = vrot.slane %v355, 4
      %v361 = vsel %vm276, 0, %v360
      %v362 = vrot.slane %v359, 4
      %v363 = vsel %vm276, 0, %v362
      %v364 = vrot.slane %v263, 4
      %v365 = vsel %vm276, %v364, %v257
      %v367 = vunpack.c.l.s4 1934713408
      %v368 = vunpack.c.0.s8 %v367
      %v369 = vperm.slane %v365, %v368
      %v370 = vrot.slane %v369, 4
      %v371 = vsel %vm276, 0, %v370
      %v372 = vrot.slane %v266, 4
      %v373 = vsel %vm276, %v372, %v260
      %v375 = vunpack.c.l.s4 1934713408
      %v376 = vunpack.c.0.s8 %v375
      %v377 = vperm.slane %v373, %v376
      %v378 = vrot.slane %v377, 4
      %v379 = vsel %vm276, 0, %v378
      %v382 = vpack.i.b16 %v307, %v283
      %v383 = vshrl.u32 %v283, 16
      %v384 = vshrl.u32 %v307, 16
      %v385 = vpack.i.b16 %v384, %v383
      %v388 = vpack.i.b16 %v313, %v289
      %v389 = vshrl.u32 %v289, 16
      %v390 = vshrl.u32 %v313, 16
      %v391 = vpack.i.b16 %v390, %v389
      %v394 = vpack.i.b16 %v311, %v287
      %v395 = vshrl.u32 %v287, 16
      %v396 = vshrl.u32 %v311, 16
      %v397 = vpack.i.b16 %v396, %v395
      %v400 = vpack.i.b16 %v315, %v291
      %v401 = vshrl.u32 %v291, 16
      %v402 = vshrl.u32 %v315, 16
      %v403 = vpack.i.b16 %v402, %v401
      %v406 = vpack.i.b16 %v355, %v331
      %v407 = vshrl.u32 %v331, 16
      %v408 = vshrl.u32 %v355, 16
      %v409 = vpack.i.b16 %v408, %v407
      %v412 = vpack.i.b16 %v361, %v337
      %v413 = vshrl.u32 %v337, 16
      %v414 = vshrl.u32 %v361, 16
      %v415 = vpack.i.b16 %v414, %v413
      %v418 = vpack.i.b16 %v359, %v335
      %v419 = vshrl.u32 %v335, 16
      %v420 = vshrl.u32 %v359, 16
      %v421 = vpack.i.b16 %v420, %v419
      %v424 = vpack.i.b16 %v363, %v339
      %v425 = vshrl.u32 %v339, 16
      %v426 = vshrl.u32 %v363, 16
      %v427 = vpack.i.b16 %v426, %v425
      %v430 = vpack.i.b16 %v377, %v369
      %v431 = vshrl.u32 %v369, 16
      %v432 = vshrl.u32 %v377, 16
      %v433 = vpack.i.b16 %v432, %v431
      %v436 = vpack.i.b16 %v379, %v371
      %v437 = vshrl.u32 %v371, 16
      %v438 = vshrl.u32 %v379, 16
      %v439 = vpack.i.b16 %v438, %v437
      %v440 = vunpack.c.l.b16 %v385
      %v441 = vpack.c.b16 %v440, %v440
      %442 = vrot.lane.b32.xlu0 %v441, 16
      %v443 = vpop.permute.xlu0 %442
      %v444 = vunpack.c.l.b16 %v388
      %v445 = vpack.c.b16 %v444, %v444
      %446 = vrot.lane.b32.xlu0 %v445, 32
      %v447 = vpop.permute.xlu0 %446
      %v448 = vunpack.c.l.b16 %v391
      %v449 = vpack.c.b16 %v448, %v448
      %450 = vrot.lane.b32.xlu0 %v449, 48
      %v451 = vpop.permute.xlu0 %450
      %v452 = vunpack.c.l.b16 %v394
      %v453 = vpack.c.b16 %v452, %v452
      %454 = vrot.lane.b32.xlu0 %v453, 64
      %v455 = vpop.permute.xlu0 %454
      %v456 = vunpack.c.l.b16 %v397
      %v457 = vpack.c.b16 %v456, %v456
      %458 = vrot.lane.b32.xlu0 %v457, 80
      %v459 = vpop.permute.xlu0 %458
      %v460 = vunpack.c.l.b16 %v400
      %v461 = vpack.c.b16 %v460, %v460
      %462 = vrot.lane.b32.xlu0 %v461, 96
      %v463 = vpop.permute.xlu0 %462
      %v464 = vunpack.c.l.b16 %v403
      %v465 = vpack.c.b16 %v464, %v464
      %466 = vrot.lane.b32.xlu0 %v465, 112
      %v467 = vpop.permute.xlu0 %466
      %v468 = vunpack.c.l.b16 %v409
      %v469 = vpack.c.b16 %v468, %v468
      %470 = vrot.lane.b32.xlu0 %v469, 16
      %v471 = vpop.permute.xlu0 %470
      %v472 = vunpack.c.l.b16 %v412
      %v473 = vpack.c.b16 %v472, %v472
      %474 = vrot.lane.b32.xlu0 %v473, 32
      %v475 = vpop.permute.xlu0 %474
      %v476 = vunpack.c.l.b16 %v415
      %v477 = vpack.c.b16 %v476, %v476
      %478 = vrot.lane.b32.xlu0 %v477, 48
      %v479 = vpop.permute.xlu0 %478
      %v480 = vunpack.c.l.b16 %v418
      %v481 = vpack.c.b16 %v480, %v480
      %482 = vrot.lane.b32.xlu0 %v481, 64
      %v483 = vpop.permute.xlu0 %482
      %v484 = vunpack.c.l.b16 %v421
      %v485 = vpack.c.b16 %v484, %v484
      %486 = vrot.lane.b32.xlu0 %v485, 80
      %v487 = vpop.permute.xlu0 %486
      %v488 = vunpack.c.l.b16 %v424
      %v489 = vpack.c.b16 %v488, %v488
      %490 = vrot.lane.b32.xlu0 %v489, 96
      %v491 = vpop.permute.xlu0 %490
      %v492 = vunpack.c.l.b16 %v427
      %v493 = vpack.c.b16 %v492, %v492
      %494 = vrot.lane.b32.xlu0 %v493, 112
      %v495 = vpop.permute.xlu0 %494
      %v496 = vunpack.c.l.b16 %v433
      %v497 = vpack.c.b16 %v496, %v496
      %498 = vrot.lane.b32.xlu0 %v497, 16
      %v499 = vpop.permute.xlu0 %498
      %v500 = vunpack.c.l.b16 %v436
      %v501 = vpack.c.b16 %v500, %v500
      %502 = vrot.lane.b32.xlu0 %v501, 32
      %v503 = vpop.permute.xlu0 %502
      %v504 = vunpack.c.l.b16 %v439
      %v505 = vpack.c.b16 %v504, %v504
      %506 = vrot.lane.b32.xlu0 %v505, 48
      %v507 = vpop.permute.xlu0 %506
      %vm508 = vcmask 130048
      %v511 = vsel %vm508, %v382, %v443
      %vm512 = vcmask 261120
      %v514 = vsel %vm512, %v511, %v447
      %vm515 = vcmask 392192
      %v517 = vsel %vm515, %v514, %v451
      %vm518 = vcmask 523264
      %v520 = vsel %vm518, %v517, %v455
      %vm521 = vcmask 654336
      %v523 = vsel %vm521, %v520, %v459
      %vm524 = vcmask 785408
      %v526 = vsel %vm524, %v523, %v463
      %vm527 = vcmask 916480
      %v529 = vsel %vm527, %v526, %v467
      %v532 = vsel %vm508, %v406, %v471
      %v534 = vsel %vm512, %v532, %v475
      %v536 = vsel %vm515, %v534, %v479
      %v538 = vsel %vm518, %v536, %v483
      %v540 = vsel %vm521, %v538, %v487
      %v542 = vsel %vm524, %v540, %v491
      %v544 = vsel %vm527, %v542, %v495
      %v547 = vsel %vm508, %v430, %v499
      %v549 = vsel %vm512, %v547, %v503
      %v551 = vsel %vm515, %v549, %v507
      %v552 = vld [vmem:[%s236] sm:$0xf]
      %s553 = scalar_lea.vmem %s236, 20
      %v554 = vld [vmem:[%s553] sm:$0xf]
      %558 = vrot.lane.b32.xlu0 %v529, 112
      %v559 = vpop.permute.xlu0 %558
      %560 = vrot.lane.b32.xlu0 %v544, 112
      %v561 = vpop.permute.xlu0 %560
      %562 = vrot.lane.b32.xlu0 %v551, 112
      %v563 = vpop.permute.xlu0 %562
      %vm564 = vcmask 916480
      %v565 = vsel %vm564, %v559, %v561
      %v566 = vsel %vm564, %v561, %v563
      %vm567 = vcmask 31744
      %v569 = vsel %vm567, %v554, 0
      %vm571 = vcmask 1041408
      %v573 = vsel %vm571, %v565, 0
      %v576 = vsel %vm571, %v566, 0
      %578 = vmatpush.bf16.msra.mxu0 0
      %579 = vmatpush.bf16.msra.mxu0 0
      %580 = vmatpush.bf16.msra.mxu0 0
      %581 = vmatpush.bf16.msra.mxu0 0
      %582 = vmatpush.bf16.msra.mxu0 0
      %583 = vmatpush.bf16.msra.mxu0 0
      %584 = vmatpush.bf16.msra.mxu0 0
      %585 = vmatpush.bf16.msra.mxu0 %v573
      %586 = vmatmul.bf16.gmra.mxu0 %v569
      %v587 = vpop.f32.mrf.mxu0
      %v588 = vadd.f32 0.0, %v587
      %v589 = vpop.f32.mrf.mxu0
      %590 = vdwg.mxu0
      %591 = vmatpush.bf16.msra.mxu0 0
      %592 = vmatpush.bf16.msra.mxu0 0
      %593 = vmatpush.bf16.msra.mxu0 0
      %594 = vmatpush.bf16.msra.mxu0 0
      %595 = vmatpush.bf16.msra.mxu0 0
      %596 = vmatpush.bf16.msra.mxu0 0
      %597 = vmatpush.bf16.msra.mxu0 0
      %598 = vmatpush.bf16.msra.mxu0 %v576
      %599 = vmatmul.bf16.gmra.mxu0 %v569
      %v600 = vpop.f32.mrf.mxu0
      %v601 = vadd.f32 0.0, %v600
      %v602 = vpop.f32.mrf.mxu0
      %603 = vdwg.mxu0
      %v605 = vsel %vm567, %v552, 0
      %v607 = vsel %vm571, %v529, 0
      %v609 = vsel %vm571, %v544, 0
      %611 = vmatpush.bf16.msra.mxu0 0
      %612 = vmatpush.bf16.msra.mxu0 0
      %613 = vmatpush.bf16.msra.mxu0 0
      %614 = vmatpush.bf16.msra.mxu0 0
      %615 = vmatpush.bf16.msra.mxu0 0
      %616 = vmatpush.bf16.msra.mxu0 0
      %617 = vmatpush.bf16.msra.mxu0 0
      %618 = vmatpush.bf16.msra.mxu0 %v607
      %619 = vmatmul.bf16.gmra.mxu0 %v605
      %v620 = vpop.f32.mrf.mxu0
      %v621 = vadd.f32 %v588, %v620
      %v622 = vpop.f32.mrf.mxu0
      %623 = vdwg.mxu0
      %624 = vmatpush.bf16.msra.mxu0 0
      %625 = vmatpush.bf16.msra.mxu0 0
      %626 = vmatpush.bf16.msra.mxu0 0
      %627 = vmatpush.bf16.msra.mxu0 0
      %628 = vmatpush.bf16.msra.mxu0 0
      %629 = vmatpush.bf16.msra.mxu0 0
      %630 = vmatpush.bf16.msra.mxu0 0
      %631 = vmatpush.bf16.msra.mxu0 %v609
      %632 = vmatmul.bf16.gmra.mxu0 %v605
      %v633 = vpop.f32.mrf.mxu0
      %v634 = vadd.f32 %v601, %v633
      %v635 = vpop.f32.mrf.mxu0
      %636 = vdwg.mxu0
      %s637 = scalar_lea.vmem %s236, 40
      %v638 = vld [vmem:[%s637] sm:$0xf]
      %639 = vrot.lane.b32.xlu0 %v529, 96
      %v640 = vpop.permute.xlu0 %639
      %641 = vrot.lane.b32.xlu0 %v544, 96
      %v642 = vpop.permute.xlu0 %641
      %643 = vrot.lane.b32.xlu0 %v551, 96
      %v644 = vpop.permute.xlu0 %643
      %vm645 = vcmask 785408
      %v646 = vsel %vm645, %v640, %v642
      %v647 = vsel %vm645, %v642, %v644
      %v649 = vsel %vm567, %v638, 0
      %v652 = vsel %vm571, %v646, 0
      %v655 = vsel %vm571, %v647, 0
      %657 = vmatpush.bf16.msra.mxu0 0
      %658 = vmatpush.bf16.msra.mxu0 0
      %659 = vmatpush.bf16.msra.mxu0 0
      %660 = vmatpush.bf16.msra.mxu0 0
      %661 = vmatpush.bf16.msra.mxu0 0
      %662 = vmatpush.bf16.msra.mxu0 0
      %663 = vmatpush.bf16.msra.mxu0 0
      %664 = vmatpush.bf16.msra.mxu0 %v652
      %665 = vmatmul.bf16.gmra.mxu0 %v649
      %v666 = vpop.f32.mrf.mxu0
      %v667 = vadd.f32 0.0, %v666
      %v668 = vpop.f32.mrf.mxu0
      %669 = vdwg.mxu0
      %670 = vmatpush.bf16.msra.mxu0 0
      %671 = vmatpush.bf16.msra.mxu0 0
      %672 = vmatpush.bf16.msra.mxu0 0
      %673 = vmatpush.bf16.msra.mxu0 0
      %674 = vmatpush.bf16.msra.mxu0 0
      %675 = vmatpush.bf16.msra.mxu0 0
      %676 = vmatpush.bf16.msra.mxu0 0
      %677 = vmatpush.bf16.msra.mxu0 %v655
      %678 = vmatmul.bf16.gmra.mxu0 %v649
      %v679 = vpop.f32.mrf.mxu0
      %v680 = vadd.f32 0.0, %v679
      %v681 = vpop.f32.mrf.mxu0
      %682 = vdwg.mxu0
      %v683 = vadd.f32 %v621, %v667
      %v684 = vadd.f32 %v634, %v680
      %s685 = scalar_lea.vmem %s236, 60
      %v686 = vld [vmem:[%s685] sm:$0xf]
      %687 = vrot.lane.b32.xlu0 %v529, 80
      %v688 = vpop.permute.xlu0 %687
      %689 = vrot.lane.b32.xlu0 %v544, 80
      %v690 = vpop.permute.xlu0 %689
      %691 = vrot.lane.b32.xlu0 %v551, 80
      %v692 = vpop.permute.xlu0 %691
      %vm693 = vcmask 654336
      %v694 = vsel %vm693, %v688, %v690
      %v695 = vsel %vm693, %v690, %v692
      %v697 = vsel %vm567, %v686, 0
      %v700 = vsel %vm571, %v694, 0
      %v703 = vsel %vm571, %v695, 0
      %705 = vmatpush.bf16.msra.mxu0 0
      %706 = vmatpush.bf16.msra.mxu0 0
      %707 = vmatpush.bf16.msra.mxu0 0
      %708 = vmatpush.bf16.msra.mxu0 0
      %709 = vmatpush.bf16.msra.mxu0 0
      %710 = vmatpush.bf16.msra.mxu0 0
      %711 = vmatpush.bf16.msra.mxu0 0
      %712 = vmatpush.bf16.msra.mxu0 %v700
      %713 = vmatmul.bf16.gmra.mxu0 %v697
      %v714 = vpop.f32.mrf.mxu0
      %v715 = vadd.f32 0.0, %v714
      %v716 = vpop.f32.mrf.mxu0
      %717 = vdwg.mxu0
      %718 = vmatpush.bf16.msra.mxu0 0
      %719 = vmatpush.bf16.msra.mxu0 0
      %720 = vmatpush.bf16.msra.mxu0 0
      %721 = vmatpush.bf16.msra.mxu0 0
      %722 = vmatpush.bf16.msra.mxu0 0
      %723 = vmatpush.bf16.msra.mxu0 0
      %724 = vmatpush.bf16.msra.mxu0 0
      %725 = vmatpush.bf16.msra.mxu0 %v703
      %726 = vmatmul.bf16.gmra.mxu0 %v697
      %v727 = vpop.f32.mrf.mxu0
      %v728 = vadd.f32 0.0, %v727
      %v729 = vpop.f32.mrf.mxu0
      %730 = vdwg.mxu0
      %v731 = vadd.f32 %v683, %v715
      %v732 = vadd.f32 %v684, %v728
      %s733 = scalar_lea.vmem %s236, 80
      %v734 = vld [vmem:[%s733] sm:$0xf]
      %735 = vrot.lane.b32.xlu0 %v529, 64
      %v736 = vpop.permute.xlu0 %735
      %737 = vrot.lane.b32.xlu0 %v544, 64
      %v738 = vpop.permute.xlu0 %737
      %739 = vrot.lane.b32.xlu0 %v551, 64
      %v740 = vpop.permute.xlu0 %739
      %vm741 = vcmask 523264
      %v742 = vsel %vm741, %v736, %v738
      %v743 = vsel %vm741, %v738, %v740
      %v745 = vsel %vm567, %v734, 0
      %v748 = vsel %vm571, %v742, 0
      %v751 = vsel %vm571, %v743, 0
      %753 = vmatpush.bf16.msra.mxu0 0
      %754 = vmatpush.bf16.msra.mxu0 0
      %755 = vmatpush.bf16.msra.mxu0 0
      %756 = vmatpush.bf16.msra.mxu0 0
      %757 = vmatpush.bf16.msra.mxu0 0
      %758 = vmatpush.bf16.msra.mxu0 0
      %759 = vmatpush.bf16.msra.mxu0 0
      %760 = vmatpush.bf16.msra.mxu0 %v748
      %761 = vmatmul.bf16.gmra.mxu0 %v745
      %v762 = vpop.f32.mrf.mxu0
      %v763 = vadd.f32 0.0, %v762
      %v764 = vpop.f32.mrf.mxu0
      %765 = vdwg.mxu0
      %766 = vmatpush.bf16.msra.mxu0 0
      %767 = vmatpush.bf16.msra.mxu0 0
      %768 = vmatpush.bf16.msra.mxu0 0
      %769 = vmatpush.bf16.msra.mxu0 0
      %770 = vmatpush.bf16.msra.mxu0 0
      %771 = vmatpush.bf16.msra.mxu0 0
      %772 = vmatpush.bf16.msra.mxu0 0
      %773 = vmatpush.bf16.msra.mxu0 %v751
      %774 = vmatmul.bf16.gmra.mxu0 %v745
      %v775 = vpop.f32.mrf.mxu0
      %v776 = vadd.f32 0.0, %v775
      %v777 = vpop.f32.mrf.mxu0
      %778 = vdwg.mxu0
      %v779 = vadd.f32 %v731, %v763
      %v780 = vadd.f32 %v732, %v776
      %793 = vrot.lane.b32.xlu0 %v255, 127
      %v794 = vpop.permute.xlu0 %793
      %795 = vrot.lane.b32.xlu0 %v256, 127
      %v796 = vpop.permute.xlu0 %795
      %797 = vrot.lane.b32.xlu0 %v257, 127
      %v798 = vpop.permute.xlu0 %797
      %799 = vrot.lane.b32.xlu0 %v258, 127
      %v800 = vpop.permute.xlu0 %799
      %801 = vrot.lane.b32.xlu0 %v259, 127
      %v802 = vpop.permute.xlu0 %801
      %803 = vrot.lane.b32.xlu0 %v260, 127
      %v804 = vpop.permute.xlu0 %803
      %805 = vrot.lane.b32.xlu0 %v261, 127
      %v806 = vpop.permute.xlu0 %805
      %807 = vrot.lane.b32.xlu0 %v262, 127
      %v808 = vpop.permute.xlu0 %807
      %809 = vrot.lane.b32.xlu0 %v263, 127
      %v810 = vpop.permute.xlu0 %809
      %811 = vrot.lane.b32.xlu0 %v264, 127
      %v812 = vpop.permute.xlu0 %811
      %813 = vrot.lane.b32.xlu0 %v265, 127
      %v814 = vpop.permute.xlu0 %813
      %815 = vrot.lane.b32.xlu0 %v266, 127
      %v816 = vpop.permute.xlu0 %815
      %v819 = vunpack.c.l.s4 1983009808
      %v820 = vunpack.c.0.s8 %v819
      %v821 = vperm.slane %v794, %v820
      %v824 = vunpack.c.l.s4 1983009808
      %v825 = vunpack.c.0.s8 %v824
      %v826 = vperm.slane %v806, %v825
      %v827 = vrot.slane %v826, 4
      %v828 = vsel %vm276, %v827, %v821
      %v829 = vrot.slane %v821, 4
      %v830 = vsel %vm276, %v826, %v829
      %v832 = vunpack.c.l.s4 1934713408
      %v833 = vunpack.c.0.s8 %v832
      %v834 = vperm.slane %v828, %v833
      %v836 = vunpack.c.l.s4 1934713408
      %v837 = vunpack.c.0.s8 %v836
      %v838 = vperm.slane %v830, %v837
      %v839 = vrot.slane %v834, 4
      %v840 = vsel %vm276, 0, %v839
      %v841 = vrot.slane %v838, 4
      %v842 = vsel %vm276, 0, %v841
      %v845 = vunpack.c.l.s4 1983009808
      %v846 = vunpack.c.0.s8 %v845
      %v847 = vperm.slane %v800, %v846
      %v850 = vunpack.c.l.s4 1983009808
      %v851 = vunpack.c.0.s8 %v850
      %v852 = vperm.slane %v812, %v851
      %v853 = vrot.slane %v852, 4
      %v854 = vsel %vm276, %v853, %v847
      %v855 = vrot.slane %v847, 4
      %v856 = vsel %vm276, %v852, %v855
      %v858 = vunpack.c.l.s4 1934713408
      %v859 = vunpack.c.0.s8 %v858
      %v860 = vperm.slane %v854, %v859
      %v862 = vunpack.c.l.s4 1934713408
      %v863 = vunpack.c.0.s8 %v862
      %v864 = vperm.slane %v856, %v863
      %v865 = vrot.slane %v860, 4
      %v866 = vsel %vm276, 0, %v865
      %v867 = vrot.slane %v864, 4
      %v868 = vsel %vm276, 0, %v867
      %v871 = vunpack.c.l.s4 1983009808
      %v872 = vunpack.c.0.s8 %v871
      %v873 = vperm.slane %v796, %v872
      %v876 = vunpack.c.l.s4 1983009808
      %v877 = vunpack.c.0.s8 %v876
      %v878 = vperm.slane %v808, %v877
      %v879 = vrot.slane %v878, 4
      %v880 = vsel %vm276, %v879, %v873
      %v881 = vrot.slane %v873, 4
      %v882 = vsel %vm276, %v878, %v881
      %v884 = vunpack.c.l.s4 1934713408
      %v885 = vunpack.c.0.s8 %v884
      %v886 = vperm.slane %v880, %v885
      %v888 = vunpack.c.l.s4 1934713408
      %v889 = vunpack.c.0.s8 %v888
      %v890 = vperm.slane %v882, %v889
      %v891 = vrot.slane %v886, 4
      %v892 = vsel %vm276, 0, %v891
      %v893 = vrot.slane %v890, 4
      %v894 = vsel %vm276, 0, %v893
      %v897 = vunpack.c.l.s4 1983009808
      %v898 = vunpack.c.0.s8 %v897
      %v899 = vperm.slane %v802, %v898
      %v902 = vunpack.c.l.s4 1983009808
      %v903 = vunpack.c.0.s8 %v902
      %v904 = vperm.slane %v814, %v903
      %v905 = vrot.slane %v904, 4
      %v906 = vsel %vm276, %v905, %v899
      %v907 = vrot.slane %v899, 4
      %v908 = vsel %vm276, %v904, %v907
      %v910 = vunpack.c.l.s4 1934713408
      %v911 = vunpack.c.0.s8 %v910
      %v912 = vperm.slane %v906, %v911
      %v914 = vunpack.c.l.s4 1934713408
      %v915 = vunpack.c.0.s8 %v914
      %v916 = vperm.slane %v908, %v915
      %v917 = vrot.slane %v912, 4
      %v918 = vsel %vm276, 0, %v917
      %v919 = vrot.slane %v916, 4
      %v920 = vsel %vm276, 0, %v919
      %v923 = vrot.slane %v810, 4
      %v924 = vsel %vm276, %v923, %v798
      %v926 = vunpack.c.l.s4 1934713408
      %v927 = vunpack.c.0.s8 %v926
      %v928 = vperm.slane %v924, %v927
      %v929 = vrot.slane %v928, 4
      %v930 = vsel %vm276, 0, %v929
      %v933 = vrot.slane %v816, 4
      %v934 = vsel %vm276, %v933, %v804
      %v936 = vunpack.c.l.s4 1934713408
      %v937 = vunpack.c.0.s8 %v936
      %v938 = vperm.slane %v934, %v937
      %v939 = vrot.slane %v938, 4
      %v940 = vsel %vm276, 0, %v939
      %v943 = vpack.i.b16 %v860, %v834
      %v944 = vshrl.u32 %v834, 16
      %v945 = vshrl.u32 %v860, 16
      %v946 = vpack.i.b16 %v945, %v944
      %v949 = vpack.i.b16 %v866, %v840
      %v950 = vshrl.u32 %v840, 16
      %v951 = vshrl.u32 %v866, 16
      %v952 = vpack.i.b16 %v951, %v950
      %v955 = vpack.i.b16 %v864, %v838
      %v956 = vshrl.u32 %v838, 16
      %v957 = vshrl.u32 %v864, 16
      %v958 = vpack.i.b16 %v957, %v956
      %v961 = vpack.i.b16 %v868, %v842
      %v962 = vshrl.u32 %v842, 16
      %v963 = vshrl.u32 %v868, 16
      %v964 = vpack.i.b16 %v963, %v962
      %v967 = vpack.i.b16 %v912, %v886
      %v968 = vshrl.u32 %v886, 16
      %v969 = vshrl.u32 %v912, 16
      %v970 = vpack.i.b16 %v969, %v968
      %v973 = vpack.i.b16 %v918, %v892
      %v974 = vshrl.u32 %v892, 16
      %v975 = vshrl.u32 %v918, 16
      %v976 = vpack.i.b16 %v975, %v974
      %v979 = vpack.i.b16 %v916, %v890
      %v980 = vshrl.u32 %v890, 16
      %v981 = vshrl.u32 %v916, 16
      %v982 = vpack.i.b16 %v981, %v980
      %v985 = vpack.i.b16 %v920, %v894
      %v986 = vshrl.u32 %v894, 16
      %v987 = vshrl.u32 %v920, 16
      %v988 = vpack.i.b16 %v987, %v986
      %v991 = vpack.i.b16 %v938, %v928
      %v992 = vshrl.u32 %v928, 16
      %v993 = vshrl.u32 %v938, 16
      %v994 = vpack.i.b16 %v993, %v992
      %v997 = vpack.i.b16 %v940, %v930
      %v998 = vshrl.u32 %v930, 16
      %v999 = vshrl.u32 %v940, 16
      %v1000 = vpack.i.b16 %v999, %v998
      %v1001 = vunpack.c.l.b16 %v946
      %v1002 = vpack.c.b16 %v1001, %v1001
      %1003 = vrot.lane.b32.xlu0 %v1002, 16
      %v1004 = vpop.permute.xlu0 %1003
      %v1005 = vunpack.c.l.b16 %v949
      %v1006 = vpack.c.b16 %v1005, %v1005
      %1007 = vrot.lane.b32.xlu0 %v1006, 32
      %v1008 = vpop.permute.xlu0 %1007
      %v1009 = vunpack.c.l.b16 %v952
      %v1010 = vpack.c.b16 %v1009, %v1009
      %1011 = vrot.lane.b32.xlu0 %v1010, 48
      %v1012 = vpop.permute.xlu0 %1011
      %v1013 = vunpack.c.l.b16 %v955
      %v1014 = vpack.c.b16 %v1013, %v1013
      %1015 = vrot.lane.b32.xlu0 %v1014, 64
      %v1016 = vpop.permute.xlu0 %1015
      %v1017 = vunpack.c.l.b16 %v958
      %v1018 = vpack.c.b16 %v1017, %v1017
      %1019 = vrot.lane.b32.xlu0 %v1018, 80
      %v1020 = vpop.permute.xlu0 %1019
      %v1021 = vunpack.c.l.b16 %v961
      %v1022 = vpack.c.b16 %v1021, %v1021
      %1023 = vrot.lane.b32.xlu0 %v1022, 96
      %v1024 = vpop.permute.xlu0 %1023
      %v1025 = vunpack.c.l.b16 %v964
      %v1026 = vpack.c.b16 %v1025, %v1025
      %1027 = vrot.lane.b32.xlu0 %v1026, 112
      %v1028 = vpop.permute.xlu0 %1027
      %v1029 = vunpack.c.l.b16 %v970
      %v1030 = vpack.c.b16 %v1029, %v1029
      %1031 = vrot.lane.b32.xlu0 %v1030, 16
      %v1032 = vpop.permute.xlu0 %1031
      %v1033 = vunpack.c.l.b16 %v973
      %v1034 = vpack.c.b16 %v1033, %v1033
      %1035 = vrot.lane.b32.xlu0 %v1034, 32
      %v1036 = vpop.permute.xlu0 %1035
      %v1037 = vunpack.c.l.b16 %v976
      %v1038 = vpack.c.b16 %v1037, %v1037
      %1039 = vrot.lane.b32.xlu0 %v1038, 48
      %v1040 = vpop.permute.xlu0 %1039
      %v1041 = vunpack.c.l.b16 %v979
      %v1042 = vpack.c.b16 %v1041, %v1041
      %1043 = vrot.lane.b32.xlu0 %v1042, 64
      %v1044 = vpop.permute.xlu0 %1043
      %v1045 = vunpack.c.l.b16 %v982
      %v1046 = vpack.c.b16 %v1045, %v1045
      %1047 = vrot.lane.b32.xlu0 %v1046, 80
      %v1048 = vpop.permute.xlu0 %1047
      %v1049 = vunpack.c.l.b16 %v985
      %v1050 = vpack.c.b16 %v1049, %v1049
      %1051 = vrot.lane.b32.xlu0 %v1050, 96
      %v1052 = vpop.permute.xlu0 %1051
      %v1053 = vunpack.c.l.b16 %v988
      %v1054 = vpack.c.b16 %v1053, %v1053
      %1055 = vrot.lane.b32.xlu0 %v1054, 112
      %v1056 = vpop.permute.xlu0 %1055
      %v1057 = vunpack.c.l.b16 %v994
      %v1058 = vpack.c.b16 %v1057, %v1057
      %1059 = vrot.lane.b32.xlu0 %v1058, 16
      %v1060 = vpop.permute.xlu0 %1059
      %v1061 = vunpack.c.l.b16 %v997
      %v1062 = vpack.c.b16 %v1061, %v1061
      %1063 = vrot.lane.b32.xlu0 %v1062, 32
      %v1064 = vpop.permute.xlu0 %1063
      %v1065 = vunpack.c.l.b16 %v1000
      %v1066 = vpack.c.b16 %v1065, %v1065
      %1067 = vrot.lane.b32.xlu0 %v1066, 48
      %v1068 = vpop.permute.xlu0 %1067
      %v1071 = vsel %vm508, %v943, %v1004
      %v1073 = vsel %vm512, %v1071, %v1008
      %v1075 = vsel %vm515, %v1073, %v1012
      %v1077 = vsel %vm518, %v1075, %v1016
      %v1079 = vsel %vm521, %v1077, %v1020
      %v1081 = vsel %vm524, %v1079, %v1024
      %v1083 = vsel %vm527, %v1081, %v1028
      %v1086 = vsel %vm508, %v967, %v1032
      %v1088 = vsel %vm512, %v1086, %v1036
      %v1090 = vsel %vm515, %v1088, %v1040
      %v1092 = vsel %vm518, %v1090, %v1044
      %v1094 = vsel %vm521, %v1092, %v1048
      %v1096 = vsel %vm524, %v1094, %v1052
      %v1098 = vsel %vm527, %v1096, %v1056
      %v1101 = vsel %vm508, %v991, %v1060
      %v1103 = vsel %vm512, %v1101, %v1064
      %v1105 = vsel %vm515, %v1103, %v1068
      %s1106 = scalar_lea.vmem %s236, 4
      %v1107 = vld [vmem:[%s1106] sm:$0xf]
      %v1109 = vsel %vm567, %v1107, 0
      %v1111 = vsel %vm571, %v1083, 0
      %v1113 = vsel %vm571, %v1098, 0
      %1115 = vmatpush.bf16.msra.mxu0 0
      %1116 = vmatpush.bf16.msra.mxu0 0
      %1117 = vmatpush.bf16.msra.mxu0 0
      %1118 = vmatpush.bf16.msra.mxu0 0
      %1119 = vmatpush.bf16.msra.mxu0 0
      %1120 = vmatpush.bf16.msra.mxu0 0
      %1121 = vmatpush.bf16.msra.mxu0 0
      %1122 = vmatpush.bf16.msra.mxu0 %v1111
      %1123 = vmatmul.bf16.gmra.mxu0 %v1109
      %v1124 = vpop.f32.mrf.mxu0
      %v1125 = vadd.f32 0.0, %v1124
      %v1126 = vpop.f32.mrf.mxu0
      %1127 = vdwg.mxu0
      %1128 = vmatpush.bf16.msra.mxu0 0
      %1129 = vmatpush.bf16.msra.mxu0 0
      %1130 = vmatpush.bf16.msra.mxu0 0
      %1131 = vmatpush.bf16.msra.mxu0 0
      %1132 = vmatpush.bf16.msra.mxu0 0
      %1133 = vmatpush.bf16.msra.mxu0 0
      %1134 = vmatpush.bf16.msra.mxu0 0
      %1135 = vmatpush.bf16.msra.mxu0 %v1113
      %1136 = vmatmul.bf16.gmra.mxu0 %v1109
      %v1137 = vpop.f32.mrf.mxu0
      %v1138 = vadd.f32 0.0, %v1137
      %v1139 = vpop.f32.mrf.mxu0
      %1140 = vdwg.mxu0
      %v1141 = vadd.f32 %v779, %v1125
      %v1142 = vadd.f32 %v780, %v1138
      %s1143 = scalar_lea.vmem %s236, 24
      %v1144 = vld [vmem:[%s1143] sm:$0xf]
      %1148 = vrot.lane.b32.xlu0 %v1083, 112
      %v1149 = vpop.permute.xlu0 %1148
      %1150 = vrot.lane.b32.xlu0 %v1098, 112
      %v1151 = vpop.permute.xlu0 %1150
      %1152 = vrot.lane.b32.xlu0 %v1105, 112
      %v1153 = vpop.permute.xlu0 %1152
      %v1154 = vsel %vm564, %v1149, %v1151
      %v1155 = vsel %vm564, %v1151, %v1153
      %v1157 = vsel %vm567, %v1144, 0
      %v1160 = vsel %vm571, %v1154, 0
      %v1163 = vsel %vm571, %v1155, 0
      %1165 = vmatpush.bf16.msra.mxu0 0
      %1166 = vmatpush.bf16.msra.mxu0 0
      %1167 = vmatpush.bf16.msra.mxu0 0
      %1168 = vmatpush.bf16.msra.mxu0 0
      %1169 = vmatpush.bf16.msra.mxu0 0
      %1170 = vmatpush.bf16.msra.mxu0 0
      %1171 = vmatpush.bf16.msra.mxu0 0
      %1172 = vmatpush.bf16.msra.mxu0 %v1160
      %1173 = vmatmul.bf16.gmra.mxu0 %v1157
      %v1174 = vpop.f32.mrf.mxu0
      %v1175 = vadd.f32 0.0, %v1174
      %v1176 = vpop.f32.mrf.mxu0
      %1177 = vdwg.mxu0
      %1178 = vmatpush.bf16.msra.mxu0 0
      %1179 = vmatpush.bf16.msra.mxu0 0
      %1180 = vmatpush.bf16.msra.mxu0 0
      %1181 = vmatpush.bf16.msra.mxu0 0
      %1182 = vmatpush.bf16.msra.mxu0 0
      %1183 = vmatpush.bf16.msra.mxu0 0
      %1184 = vmatpush.bf16.msra.mxu0 0
      %1185 = vmatpush.bf16.msra.mxu0 %v1163
      %1186 = vmatmul.bf16.gmra.mxu0 %v1157
      %v1187 = vpop.f32.mrf.mxu0
      %v1188 = vadd.f32 0.0, %v1187
      %v1189 = vpop.f32.mrf.mxu0
      %1190 = vdwg.mxu0
      %v1191 = vadd.f32 %v1141, %v1175
      %v1192 = vadd.f32 %v1142, %v1188
      %s1193 = scalar_lea.vmem %s236, 44
      %v1194 = vld [vmem:[%s1193] sm:$0xf]
      %1195 = vrot.lane.b32.xlu0 %v1083, 96
      %v1196 = vpop.permute.xlu0 %1195
      %1197 = vrot.lane.b32.xlu0 %v1098, 96
      %v1198 = vpop.permute.xlu0 %1197
      %1199 = vrot.lane.b32.xlu0 %v1105, 96
      %v1200 = vpop.permute.xlu0 %1199
      %v1201 = vsel %vm645, %v1196, %v1198
      %v1202 = vsel %vm645, %v1198, %v1200
      %v1204 = vsel %vm567, %v1194, 0
      %v1207 = vsel %vm571, %v1201, 0
      %v1210 = vsel %vm571, %v1202, 0
      %1212 = vmatpush.bf16.msra.mxu0 0
      %1213 = vmatpush.bf16.msra.mxu0 0
      %1214 = vmatpush.bf16.msra.mxu0 0
      %1215 = vmatpush.bf16.msra.mxu0 0
      %1216 = vmatpush.bf16.msra.mxu0 0
      %1217 = vmatpush.bf16.msra.mxu0 0
      %1218 = vmatpush.bf16.msra.mxu0 0
      %1219 = vmatpush.bf16.msra.mxu0 %v1207
      %1220 = vmatmul.bf16.gmra.mxu0 %v1204
      %v1221 = vpop.f32.mrf.mxu0
      %v1222 = vadd.f32 0.0, %v1221
      %v1223 = vpop.f32.mrf.mxu0
      %1224 = vdwg.mxu0
      %1225 = vmatpush.bf16.msra.mxu0 0
      %1226 = vmatpush.bf16.msra.mxu0 0
      %1227 = vmatpush.bf16.msra.mxu0 0
      %1228 = vmatpush.bf16.msra.mxu0 0
      %1229 = vmatpush.bf16.msra.mxu0 0
      %1230 = vmatpush.bf16.msra.mxu0 0
      %1231 = vmatpush.bf16.msra.mxu0 0
      %1232 = vmatpush.bf16.msra.mxu0 %v1210
      %1233 = vmatmul.bf16.gmra.mxu0 %v1204
      %v1234 = vpop.f32.mrf.mxu0
      %v1235 = vadd.f32 0.0, %v1234
      %v1236 = vpop.f32.mrf.mxu0
      %1237 = vdwg.mxu0
      %v1238 = vadd.f32 %v1191, %v1222
      %v1239 = vadd.f32 %v1192, %v1235
      %s1240 = scalar_lea.vmem %s236, 64
      %v1241 = vld [vmem:[%s1240] sm:$0xf]
      %1242 = vrot.lane.b32.xlu0 %v1083, 80
      %v1243 = vpop.permute.xlu0 %1242
      %1244 = vrot.lane.b32.xlu0 %v1098, 80
      %v1245 = vpop.permute.xlu0 %1244
      %1246 = vrot.lane.b32.xlu0 %v1105, 80
      %v1247 = vpop.permute.xlu0 %1246
      %v1248 = vsel %vm693, %v1243, %v1245
      %v1249 = vsel %vm693, %v1245, %v1247
      %v1251 = vsel %vm567, %v1241, 0
      %v1254 = vsel %vm571, %v1248, 0
      %v1257 = vsel %vm571, %v1249, 0
      %1259 = vmatpush.bf16.msra.mxu0 0
      %1260 = vmatpush.bf16.msra.mxu0 0
      %1261 = vmatpush.bf16.msra.mxu0 0
      %1262 = vmatpush.bf16.msra.mxu0 0
      %1263 = vmatpush.bf16.msra.mxu0 0
      %1264 = vmatpush.bf16.msra.mxu0 0
      %1265 = vmatpush.bf16.msra.mxu0 0
      %1266 = vmatpush.bf16.msra.mxu0 %v1254
      %1267 = vmatmul.bf16.gmra.mxu0 %v1251
      %v1268 = vpop.f32.mrf.mxu0
      %v1269 = vadd.f32 0.0, %v1268
      %v1270 = vpop.f32.mrf.mxu0
      %1271 = vdwg.mxu0
      %1272 = vmatpush.bf16.msra.mxu0 0
      %1273 = vmatpush.bf16.msra.mxu0 0
      %1274 = vmatpush.bf16.msra.mxu0 0
      %1275 = vmatpush.bf16.msra.mxu0 0
      %1276 = vmatpush.bf16.msra.mxu0 0
      %1277 = vmatpush.bf16.msra.mxu0 0
      %1278 = vmatpush.bf16.msra.mxu0 0
      %1279 = vmatpush.bf16.msra.mxu0 %v1257
      %1280 = vmatmul.bf16.gmra.mxu0 %v1251
      %v1281 = vpop.f32.mrf.mxu0
      %v1282 = vadd.f32 0.0, %v1281
      %v1283 = vpop.f32.mrf.mxu0
      %1284 = vdwg.mxu0
      %v1285 = vadd.f32 %v1238, %v1269
      %v1286 = vadd.f32 %v1239, %v1282
      %s1287 = scalar_lea.vmem %s236, 84
      %v1288 = vld [vmem:[%s1287] sm:$0xf]
      %1289 = vrot.lane.b32.xlu0 %v1083, 64
      %v1290 = vpop.permute.xlu0 %1289
      %1291 = vrot.lane.b32.xlu0 %v1098, 64
      %v1292 = vpop.permute.xlu0 %1291
      %1293 = vrot.lane.b32.xlu0 %v1105, 64
      %v1294 = vpop.permute.xlu0 %1293
      %v1295 = vsel %vm741, %v1290, %v1292
      %v1296 = vsel %vm741, %v1292, %v1294
      %v1298 = vsel %vm567, %v1288, 0
      %v1301 = vsel %vm571, %v1295, 0
      %v1304 = vsel %vm571, %v1296, 0
      %1306 = vmatpush.bf16.msra.mxu0 0
      %1307 = vmatpush.bf16.msra.mxu0 0
      %1308 = vmatpush.bf16.msra.mxu0 0
      %1309 = vmatpush.bf16.msra.mxu0 0
      %1310 = vmatpush.bf16.msra.mxu0 0
      %1311 = vmatpush.bf16.msra.mxu0 0
      %1312 = vmatpush.bf16.msra.mxu0 0
      %1313 = vmatpush.bf16.msra.mxu0 %v1301
      %1314 = vmatmul.bf16.gmra.mxu0 %v1298
      %v1315 = vpop.f32.mrf.mxu0
      %v1316 = vadd.f32 0.0, %v1315
      %v1317 = vpop.f32.mrf.mxu0
      %1318 = vdwg.mxu0
      %1319 = vmatpush.bf16.msra.mxu0 0
      %1320 = vmatpush.bf16.msra.mxu0 0
      %1321 = vmatpush.bf16.msra.mxu0 0
      %1322 = vmatpush.bf16.msra.mxu0 0
      %1323 = vmatpush.bf16.msra.mxu0 0
      %1324 = vmatpush.bf16.msra.mxu0 0
      %1325 = vmatpush.bf16.msra.mxu0 0
      %1326 = vmatpush.bf16.msra.mxu0 %v1304
      %1327 = vmatmul.bf16.gmra.mxu0 %v1298
      %v1328 = vpop.f32.mrf.mxu0
      %v1329 = vadd.f32 0.0, %v1328
      %v1330 = vpop.f32.mrf.mxu0
      %1331 = vdwg.mxu0
      %v1332 = vadd.f32 %v1285, %v1316
      %v1333 = vadd.f32 %v1286, %v1329
      %1334 = vrot.lane.b32.xlu0 %v255, 126
      %v1335 = vpop.permute.xlu0 %1334
      %1336 = vrot.lane.b32.xlu0 %v256, 126
      %v1337 = vpop.permute.xlu0 %1336
      %1338 = vrot.lane.b32.xlu0 %v257, 126
      %v1339 = vpop.permute.xlu0 %1338
      %1340 = vrot.lane.b32.xlu0 %v258, 126
      %v1341 = vpop.permute.xlu0 %1340
      %1342 = vrot.lane.b32.xlu0 %v259, 126
      %v1343 = vpop.permute.xlu0 %1342
      %1344 = vrot.lane.b32.xlu0 %v260, 126
      %v1345 = vpop.permute.xlu0 %1344
      %1346 = vrot.lane.b32.xlu0 %v261, 126
      %v1347 = vpop.permute.xlu0 %1346
      %1348 = vrot.lane.b32.xlu0 %v262, 126
      %v1349 = vpop.permute.xlu0 %1348
      %1350 = vrot.lane.b32.xlu0 %v263, 126
      %v1351 = vpop.permute.xlu0 %1350
      %1352 = vrot.lane.b32.xlu0 %v264, 126
      %v1353 = vpop.permute.xlu0 %1352
      %1354 = vrot.lane.b32.xlu0 %v265, 126
      %v1355 = vpop.permute.xlu0 %1354
      %1356 = vrot.lane.b32.xlu0 %v266, 126
      %v1357 = vpop.permute.xlu0 %1356
      %v1360 = vunpack.c.l.s4 1983009808
      %v1361 = vunpack.c.0.s8 %v1360
      %v1362 = vperm.slane %v1335, %v1361
      %v1365 = vunpack.c.l.s4 1983009808
      %v1366 = vunpack.c.0.s8 %v1365
      %v1367 = vperm.slane %v1347, %v1366
      %v1368 = vrot.slane %v1367, 4
      %v1369 = vsel %vm276, %v1368, %v1362
      %v1370 = vrot.slane %v1362, 4
      %v1371 = vsel %vm276, %v1367, %v1370
      %v1373 = vunpack.c.l.s4 1934713408
      %v1374 = vunpack.c.0.s8 %v1373
      %v1375 = vperm.slane %v1369, %v1374
      %v1377 = vunpack.c.l.s4 1934713408
      %v1378 = vunpack.c.0.s8 %v1377
      %v1379 = vperm.slane %v1371, %v1378
      %v1380 = vrot.slane %v1375, 4
      %v1381 = vsel %vm276, 0, %v1380
      %v1382 = vrot.slane %v1379, 4
      %v1383 = vsel %vm276, 0, %v1382
      %v1386 = vunpack.c.l.s4 1983009808
      %v1387 = vunpack.c.0.s8 %v1386
      %v1388 = vperm.slane %v1341, %v1387
      %v1391 = vunpack.c.l.s4 1983009808
      %v1392 = vunpack.c.0.s8 %v1391
      %v1393 = vperm.slane %v1353, %v1392
      %v1394 = vrot.slane %v1393, 4
      %v1395 = vsel %vm276, %v1394, %v1388
      %v1396 = vrot.slane %v1388, 4
      %v1397 = vsel %vm276, %v1393, %v1396
      %v1399 = vunpack.c.l.s4 1934713408
      %v1400 = vunpack.c.0.s8 %v1399
      %v1401 = vperm.slane %v1395, %v1400
      %v1403 = vunpack.c.l.s4 1934713408
      %v1404 = vunpack.c.0.s8 %v1403
      %v1405 = vperm.slane %v1397, %v1404
      %v1406 = vrot.slane %v1401, 4
      %v1407 = vsel %vm276, 0, %v1406
      %v1408 = vrot.slane %v1405, 4
      %v1409 = vsel %vm276, 0, %v1408
      %v1412 = vunpack.c.l.s4 1983009808
      %v1413 = vunpack.c.0.s8 %v1412
      %v1414 = vperm.slane %v1337, %v1413
      %v1417 = vunpack.c.l.s4 1983009808
      %v1418 = vunpack.c.0.s8 %v1417
      %v1419 = vperm.slane %v1349, %v1418
      %v1420 = vrot.slane %v1419, 4
      %v1421 = vsel %vm276, %v1420, %v1414
      %v1422 = vrot.slane %v1414, 4
      %v1423 = vsel %vm276, %v1419, %v1422
      %v1425 = vunpack.c.l.s4 1934713408
      %v1426 = vunpack.c.0.s8 %v1425
      %v1427 = vperm.slane %v1421, %v1426
      %v1429 = vunpack.c.l.s4 1934713408
      %v1430 = vunpack.c.0.s8 %v1429
      %v1431 = vperm.slane %v1423, %v1430
      %v1432 = vrot.slane %v1427, 4
      %v1433 = vsel %vm276, 0, %v1432
      %v1434 = vrot.slane %v1431, 4
      %v1435 = vsel %vm276, 0, %v1434
      %v1438 = vunpack.c.l.s4 1983009808
      %v1439 = vunpack.c.0.s8 %v1438
      %v1440 = vperm.slane %v1343, %v1439
      %v1443 = vunpack.c.l.s4 1983009808
      %v1444 = vunpack.c.0.s8 %v1443
      %v1445 = vperm.slane %v1355, %v1444
      %v1446 = vrot.slane %v1445, 4
      %v1447 = vsel %vm276, %v1446, %v1440
      %v1448 = vrot.slane %v1440, 4
      %v1449 = vsel %vm276, %v1445, %v1448
      %v1451 = vunpack.c.l.s4 1934713408
      %v1452 = vunpack.c.0.s8 %v1451
      %v1453 = vperm.slane %v1447, %v1452
      %v1455 = vunpack.c.l.s4 1934713408
      %v1456 = vunpack.c.0.s8 %v1455
      %v1457 = vperm.slane %v1449, %v1456
      %v1458 = vrot.slane %v1453, 4
      %v1459 = vsel %vm276, 0, %v1458
      %v1460 = vrot.slane %v1457, 4
      %v1461 = vsel %vm276, 0, %v1460
      %v1464 = vrot.slane %v1351, 4
      %v1465 = vsel %vm276, %v1464, %v1339
      %v1467 = vunpack.c.l.s4 1934713408
      %v1468 = vunpack.c.0.s8 %v1467
      %v1469 = vperm.slane %v1465, %v1468
      %v1470 = vrot.slane %v1469, 4
      %v1471 = vsel %vm276, 0, %v1470
      %v1474 = vrot.slane %v1357, 4
      %v1475 = vsel %vm276, %v1474, %v1345
      %v1477 = vunpack.c.l.s4 1934713408
      %v1478 = vunpack.c.0.s8 %v1477
      %v1479 = vperm.slane %v1475, %v1478
      %v1480 = vrot.slane %v1479, 4
      %v1481 = vsel %vm276, 0, %v1480
      %v1484 = vpack.i.b16 %v1401, %v1375
      %v1485 = vshrl.u32 %v1375, 16
      %v1486 = vshrl.u32 %v1401, 16
      %v1487 = vpack.i.b16 %v1486, %v1485
      %v1490 = vpack.i.b16 %v1407, %v1381
      %v1491 = vshrl.u32 %v1381, 16
      %v1492 = vshrl.u32 %v1407, 16
      %v1493 = vpack.i.b16 %v1492, %v1491
      %v1496 = vpack.i.b16 %v1405, %v1379
      %v1497 = vshrl.u32 %v1379, 16
      %v1498 = vshrl.u32 %v1405, 16
      %v1499 = vpack.i.b16 %v1498, %v1497
      %v1502 = vpack.i.b16 %v1409, %v1383
      %v1503 = vshrl.u32 %v1383, 16
      %v1504 = vshrl.u32 %v1409, 16
      %v1505 = vpack.i.b16 %v1504, %v1503
      %v1508 = vpack.i.b16 %v1453, %v1427
      %v1509 = vshrl.u32 %v1427, 16
      %v1510 = vshrl.u32 %v1453, 16
      %v1511 = vpack.i.b16 %v1510, %v1509
      %v1514 = vpack.i.b16 %v1459, %v1433
      %v1515 = vshrl.u32 %v1433, 16
      %v1516 = vshrl.u32 %v1459, 16
      %v1517 = vpack.i.b16 %v1516, %v1515
      %v1520 = vpack.i.b16 %v1457, %v1431
      %v1521 = vshrl.u32 %v1431, 16
      %v1522 = vshrl.u32 %v1457, 16
      %v1523 = vpack.i.b16 %v1522, %v1521
      %v1526 = vpack.i.b16 %v1461, %v1435
      %v1527 = vshrl.u32 %v1435, 16
      %v1528 = vshrl.u32 %v1461, 16
      %v1529 = vpack.i.b16 %v1528, %v1527
      %v1532 = vpack.i.b16 %v1479, %v1469
      %v1533 = vshrl.u32 %v1469, 16
      %v1534 = vshrl.u32 %v1479, 16
      %v1535 = vpack.i.b16 %v1534, %v1533
      %v1538 = vpack.i.b16 %v1481, %v1471
      %v1539 = vshrl.u32 %v1471, 16
      %v1540 = vshrl.u32 %v1481, 16
      %v1541 = vpack.i.b16 %v1540, %v1539
      %v1542 = vunpack.c.l.b16 %v1487
      %v1543 = vpack.c.b16 %v1542, %v1542
      %1544 = vrot.lane.b32.xlu0 %v1543, 16
      %v1545 = vpop.permute.xlu0 %1544
      %v1546 = vunpack.c.l.b16 %v1490
      %v1547 = vpack.c.b16 %v1546, %v1546
      %1548 = vrot.lane.b32.xlu0 %v1547, 32
      %v1549 = vpop.permute.xlu0 %1548
      %v1550 = vunpack.c.l.b16 %v1493
      %v1551 = vpack.c.b16 %v1550, %v1550
      %1552 = vrot.lane.b32.xlu0 %v1551, 48
      %v1553 = vpop.permute.xlu0 %1552
      %v1554 = vunpack.c.l.b16 %v1496
      %v1555 = vpack.c.b16 %v1554, %v1554
      %1556 = vrot.lane.b32.xlu0 %v1555, 64
      %v1557 = vpop.permute.xlu0 %1556
      %v1558 = vunpack.c.l.b16 %v1499
      %v1559 = vpack.c.b16 %v1558, %v1558
      %1560 = vrot.lane.b32.xlu0 %v1559, 80
      %v1561 = vpop.permute.xlu0 %1560
      %v1562 = vunpack.c.l.b16 %v1502
      %v1563 = vpack.c.b16 %v1562, %v1562
      %1564 = vrot.lane.b32.xlu0 %v1563, 96
      %v1565 = vpop.permute.xlu0 %1564
      %v1566 = vunpack.c.l.b16 %v1505
      %v1567 = vpack.c.b16 %v1566, %v1566
      %1568 = vrot.lane.b32.xlu0 %v1567, 112
      %v1569 = vpop.permute.xlu0 %1568
      %v1570 = vunpack.c.l.b16 %v1511
      %v1571 = vpack.c.b16 %v1570, %v1570
      %1572 = vrot.lane.b32.xlu0 %v1571, 16
      %v1573 = vpop.permute.xlu0 %1572
      %v1574 = vunpack.c.l.b16 %v1514
      %v1575 = vpack.c.b16 %v1574, %v1574
      %1576 = vrot.lane.b32.xlu0 %v1575, 32
      %v1577 = vpop.permute.xlu0 %1576
      %v1578 = vunpack.c.l.b16 %v1517
      %v1579 = vpack.c.b16 %v1578, %v1578
      %1580 = vrot.lane.b32.xlu0 %v1579, 48
      %v1581 = vpop.permute.xlu0 %1580
      %v1582 = vunpack.c.l.b16 %v1520
      %v1583 = vpack.c.b16 %v1582, %v1582
      %1584 = vrot.lane.b32.xlu0 %v1583, 64
      %v1585 = vpop.permute.xlu0 %1584
      %v1586 = vunpack.c.l.b16 %v1523
      %v1587 = vpack.c.b16 %v1586, %v1586
      %1588 = vrot.lane.b32.xlu0 %v1587, 80
      %v1589 = vpop.permute.xlu0 %1588
      %v1590 = vunpack.c.l.b16 %v1526
      %v1591 = vpack.c.b16 %v1590, %v1590
      %1592 = vrot.lane.b32.xlu0 %v1591, 96
      %v1593 = vpop.permute.xlu0 %1592
      %v1594 = vunpack.c.l.b16 %v1529
      %v1595 = vpack.c.b16 %v1594, %v1594
      %1596 = vrot.lane.b32.xlu0 %v1595, 112
      %v1597 = vpop.permute.xlu0 %1596
      %v1598 = vunpack.c.l.b16 %v1535
      %v1599 = vpack.c.b16 %v1598, %v1598
      %1600 = vrot.lane.b32.xlu0 %v1599, 16
      %v1601 = vpop.permute.xlu0 %1600
      %v1602 = vunpack.c.l.b16 %v1538
      %v1603 = vpack.c.b16 %v1602, %v1602
      %1604 = vrot.lane.b32.xlu0 %v1603, 32
      %v1605 = vpop.permute.xlu0 %1604
      %v1606 = vunpack.c.l.b16 %v1541
      %v1607 = vpack.c.b16 %v1606, %v1606
      %1608 = vrot.lane.b32.xlu0 %v1607, 48
      %v1609 = vpop.permute.xlu0 %1608
      %v1612 = vsel %vm508, %v1484, %v1545
      %v1614 = vsel %vm512, %v1612, %v1549
      %v1616 = vsel %vm515, %v1614, %v1553
      %v1618 = vsel %vm518, %v1616, %v1557
      %v1620 = vsel %vm521, %v1618, %v1561
      %v1622 = vsel %vm524, %v1620, %v1565
      %v1624 = vsel %vm527, %v1622, %v1569
      %v1627 = vsel %vm508, %v1508, %v1573
      %v1629 = vsel %vm512, %v1627, %v1577
      %v1631 = vsel %vm515, %v1629, %v1581
      %v1633 = vsel %vm518, %v1631, %v1585
      %v1635 = vsel %vm521, %v1633, %v1589
      %v1637 = vsel %vm524, %v1635, %v1593
      %v1639 = vsel %vm527, %v1637, %v1597
      %v1642 = vsel %vm508, %v1532, %v1601
      %v1644 = vsel %vm512, %v1642, %v1605
      %v1646 = vsel %vm515, %v1644, %v1609
      %s1647 = scalar_lea.vmem %s236, 8
      %v1648 = vld [vmem:[%s1647] sm:$0xf]
      %v1650 = vsel %vm567, %v1648, 0
      %v1652 = vsel %vm571, %v1624, 0
      %v1654 = vsel %vm571, %v1639, 0
      %1656 = vmatpush.bf16.msra.mxu0 0
      %1657 = vmatpush.bf16.msra.mxu0 0
      %1658 = vmatpush.bf16.msra.mxu0 0
      %1659 = vmatpush.bf16.msra.mxu0 0
      %1660 = vmatpush.bf16.msra.mxu0 0
      %1661 = vmatpush.bf16.msra.mxu0 0
      %1662 = vmatpush.bf16.msra.mxu0 0
      %1663 = vmatpush.bf16.msra.mxu0 %v1652
      %1664 = vmatmul.bf16.gmra.mxu0 %v1650
      %v1665 = vpop.f32.mrf.mxu0
      %v1666 = vadd.f32 0.0, %v1665
      %v1667 = vpop.f32.mrf.mxu0
      %1668 = vdwg.mxu0
      %1669 = vmatpush.bf16.msra.mxu0 0
      %1670 = vmatpush.bf16.msra.mxu0 0
      %1671 = vmatpush.bf16.msra.mxu0 0
      %1672 = vmatpush.bf16.msra.mxu0 0
      %1673 = vmatpush.bf16.msra.mxu0 0
      %1674 = vmatpush.bf16.msra.mxu0 0
      %1675 = vmatpush.bf16.msra.mxu0 0
      %1676 = vmatpush.bf16.msra.mxu0 %v1654
      %1677 = vmatmul.bf16.gmra.mxu0 %v1650
      %v1678 = vpop.f32.mrf.mxu0
      %v1679 = vadd.f32 0.0, %v1678
      %v1680 = vpop.f32.mrf.mxu0
      %1681 = vdwg.mxu0
      %v1682 = vadd.f32 %v1332, %v1666
      %v1683 = vadd.f32 %v1333, %v1679
      %s1684 = scalar_lea.vmem %s236, 28
      %v1685 = vld [vmem:[%s1684] sm:$0xf]
      %1689 = vrot.lane.b32.xlu0 %v1624, 112
      %v1690 = vpop.permute.xlu0 %1689
      %1691 = vrot.lane.b32.xlu0 %v1639, 112
      %v1692 = vpop.permute.xlu0 %1691
      %1693 = vrot.lane.b32.xlu0 %v1646, 112
      %v1694 = vpop.permute.xlu0 %1693
      %v1695 = vsel %vm564, %v1690, %v1692
      %v1696 = vsel %vm564, %v1692, %v1694
      %v1698 = vsel %vm567, %v1685, 0
      %v1701 = vsel %vm571, %v1695, 0
      %v1704 = vsel %vm571, %v1696, 0
      %1706 = vmatpush.bf16.msra.mxu0 0
      %1707 = vmatpush.bf16.msra.mxu0 0
      %1708 = vmatpush.bf16.msra.mxu0 0
      %1709 = vmatpush.bf16.msra.mxu0 0
      %1710 = vmatpush.bf16.msra.mxu0 0
      %1711 = vmatpush.bf16.msra.mxu0 0
      %1712 = vmatpush.bf16.msra.mxu0 0
      %1713 = vmatpush.bf16.msra.mxu0 %v1701
      %1714 = vmatmul.bf16.gmra.mxu0 %v1698
      %v1715 = vpop.f32.mrf.mxu0
      %v1716 = vadd.f32 0.0, %v1715
      %v1717 = vpop.f32.mrf.mxu0
      %1718 = vdwg.mxu0
      %1719 = vmatpush.bf16.msra.mxu0 0
      %1720 = vmatpush.bf16.msra.mxu0 0
      %1721 = vmatpush.bf16.msra.mxu0 0
      %1722 = vmatpush.bf16.msra.mxu0 0
      %1723 = vmatpush.bf16.msra.mxu0 0
      %1724 = vmatpush.bf16.msra.mxu0 0
      %1725 = vmatpush.bf16.msra.mxu0 0
      %1726 = vmatpush.bf16.msra.mxu0 %v1704
      %1727 = vmatmul.bf16.gmra.mxu0 %v1698
      %v1728 = vpop.f32.mrf.mxu0
      %v1729 = vadd.f32 0.0, %v1728
      %v1730 = vpop.f32.mrf.mxu0
      %1731 = vdwg.mxu0
      %v1732 = vadd.f32 %v1682, %v1716
      %v1733 = vadd.f32 %v1683, %v1729
      %s1734 = scalar_lea.vmem %s236, 48
      %v1735 = vld [vmem:[%s1734] sm:$0xf]
      %1736 = vrot.lane.b32.xlu0 %v1624, 96
      %v1737 = vpop.permute.xlu0 %1736
      %1738 = vrot.lane.b32.xlu0 %v1639, 96
      %v1739 = vpop.permute.xlu0 %1738
      %1740 = vrot.lane.b32.xlu0 %v1646, 96
      %v1741 = vpop.permute.xlu0 %1740
      %v1742 = vsel %vm645, %v1737, %v1739
      %v1743 = vsel %vm645, %v1739, %v1741
      %v1745 = vsel %vm567, %v1735, 0
      %v1748 = vsel %vm571, %v1742, 0
      %v1751 = vsel %vm571, %v1743, 0
      %1753 = vmatpush.bf16.msra.mxu0 0
      %1754 = vmatpush.bf16.msra.mxu0 0
      %1755 = vmatpush.bf16.msra.mxu0 0
      %1756 = vmatpush.bf16.msra.mxu0 0
      %1757 = vmatpush.bf16.msra.mxu0 0
      %1758 = vmatpush.bf16.msra.mxu0 0
      %1759 = vmatpush.bf16.msra.mxu0 0
      %1760 = vmatpush.bf16.msra.mxu0 %v1748
      %1761 = vmatmul.bf16.gmra.mxu0 %v1745
      %v1762 = vpop.f32.mrf.mxu0
      %v1763 = vadd.f32 0.0, %v1762
      %v1764 = vpop.f32.mrf.mxu0
      %1765 = vdwg.mxu0
      %1766 = vmatpush.bf16.msra.mxu0 0
      %1767 = vmatpush.bf16.msra.mxu0 0
      %1768 = vmatpush.bf16.msra.mxu0 0
      %1769 = vmatpush.bf16.msra.mxu0 0
      %1770 = vmatpush.bf16.msra.mxu0 0
      %1771 = vmatpush.bf16.msra.mxu0 0
      %1772 = vmatpush.bf16.msra.mxu0 0
      %1773 = vmatpush.bf16.msra.mxu0 %v1751
      %1774 = vmatmul.bf16.gmra.mxu0 %v1745
      %v1775 = vpop.f32.mrf.mxu0
      %v1776 = vadd.f32 0.0, %v1775
      %v1777 = vpop.f32.mrf.mxu0
      %1778 = vdwg.mxu0
      %v1779 = vadd.f32 %v1732, %v1763
      %v1780 = vadd.f32 %v1733, %v1776
      %s1781 = scalar_lea.vmem %s236, 68
      %v1782 = vld [vmem:[%s1781] sm:$0xf]
      %1783 = vrot.lane.b32.xlu0 %v1624, 80
      %v1784 = vpop.permute.xlu0 %1783
      %1785 = vrot.lane.b32.xlu0 %v1639, 80
      %v1786 = vpop.permute.xlu0 %1785
      %1787 = vrot.lane.b32.xlu0 %v1646, 80
      %v1788 = vpop.permute.xlu0 %1787
      %v1789 = vsel %vm693, %v1784, %v1786
      %v1790 = vsel %vm693, %v1786, %v1788
      %v1792 = vsel %vm567, %v1782, 0
      %v1795 = vsel %vm571, %v1789, 0
      %v1798 = vsel %vm571, %v1790, 0
      %1800 = vmatpush.bf16.msra.mxu0 0
      %1801 = vmatpush.bf16.msra.mxu0 0
      %1802 = vmatpush.bf16.msra.mxu0 0
      %1803 = vmatpush.bf16.msra.mxu0 0
      %1804 = vmatpush.bf16.msra.mxu0 0
      %1805 = vmatpush.bf16.msra.mxu0 0
      %1806 = vmatpush.bf16.msra.mxu0 0
      %1807 = vmatpush.bf16.msra.mxu0 %v1795
      %1808 = vmatmul.bf16.gmra.mxu0 %v1792
      %v1809 = vpop.f32.mrf.mxu0
      %v1810 = vadd.f32 0.0, %v1809
      %v1811 = vpop.f32.mrf.mxu0
      %1812 = vdwg.mxu0
      %1813 = vmatpush.bf16.msra.mxu0 0
      %1814 = vmatpush.bf16.msra.mxu0 0
      %1815 = vmatpush.bf16.msra.mxu0 0
      %1816 = vmatpush.bf16.msra.mxu0 0
      %1817 = vmatpush.bf16.msra.mxu0 0
      %1818 = vmatpush.bf16.msra.mxu0 0
      %1819 = vmatpush.bf16.msra.mxu0 0
      %1820 = vmatpush.bf16.msra.mxu0 %v1798
      %1821 = vmatmul.bf16.gmra.mxu0 %v1792
      %v1822 = vpop.f32.mrf.mxu0
      %v1823 = vadd.f32 0.0, %v1822
      %v1824 = vpop.f32.mrf.mxu0
      %1825 = vdwg.mxu0
      %v1826 = vadd.f32 %v1779, %v1810
      %v1827 = vadd.f32 %v1780, %v1823
      %s1828 = scalar_lea.vmem %s236, 88
      %v1829 = vld [vmem:[%s1828] sm:$0xf]
      %1830 = vrot.lane.b32.xlu0 %v1624, 64
      %v1831 = vpop.permute.xlu0 %1830
      %1832 = vrot.lane.b32.xlu0 %v1639, 64
      %v1833 = vpop.permute.xlu0 %1832
      %1834 = vrot.lane.b32.xlu0 %v1646, 64
      %v1835 = vpop.permute.xlu0 %1834
      %v1836 = vsel %vm741, %v1831, %v1833
      %v1837 = vsel %vm741, %v1833, %v1835
      %v1839 = vsel %vm567, %v1829, 0
      %v1842 = vsel %vm571, %v1836, 0
      %v1845 = vsel %vm571, %v1837, 0
      %1847 = vmatpush.bf16.msra.mxu0 0
      %1848 = vmatpush.bf16.msra.mxu0 0
      %1849 = vmatpush.bf16.msra.mxu0 0
      %1850 = vmatpush.bf16.msra.mxu0 0
      %1851 = vmatpush.bf16.msra.mxu0 0
      %1852 = vmatpush.bf16.msra.mxu0 0
      %1853 = vmatpush.bf16.msra.mxu0 0
      %1854 = vmatpush.bf16.msra.mxu0 %v1842
      %1855 = vmatmul.bf16.gmra.mxu0 %v1839
      %v1856 = vpop.f32.mrf.mxu0
      %v1857 = vadd.f32 0.0, %v1856
      %v1858 = vpop.f32.mrf.mxu0
      %1859 = vdwg.mxu0
      %1860 = vmatpush.bf16.msra.mxu0 0
      %1861 = vmatpush.bf16.msra.mxu0 0
      %1862 = vmatpush.bf16.msra.mxu0 0
      %1863 = vmatpush.bf16.msra.mxu0 0
      %1864 = vmatpush.bf16.msra.mxu0 0
      %1865 = vmatpush.bf16.msra.mxu0 0
      %1866 = vmatpush.bf16.msra.mxu0 0
      %1867 = vmatpush.bf16.msra.mxu0 %v1845
      %1868 = vmatmul.bf16.gmra.mxu0 %v1839
      %v1869 = vpop.f32.mrf.mxu0
      %v1870 = vadd.f32 0.0, %v1869
      %v1871 = vpop.f32.mrf.mxu0
      %1872 = vdwg.mxu0
      %v1873 = vadd.f32 %v1826, %v1857
      %v1874 = vadd.f32 %v1827, %v1870
      %1875 = vrot.lane.b32.xlu0 %v255, 125
      %v1876 = vpop.permute.xlu0 %1875
      %1877 = vrot.lane.b32.xlu0 %v256, 125
      %v1878 = vpop.permute.xlu0 %1877
      %1879 = vrot.lane.b32.xlu0 %v257, 125
      %v1880 = vpop.permute.xlu0 %1879
      %1881 = vrot.lane.b32.xlu0 %v258, 125
      %v1882 = vpop.permute.xlu0 %1881
      %1883 = vrot.lane.b32.xlu0 %v259, 125
      %v1884 = vpop.permute.xlu0 %1883
      %1885 = vrot.lane.b32.xlu0 %v260, 125
      %v1886 = vpop.permute.xlu0 %1885
      %1887 = vrot.lane.b32.xlu0 %v261, 125
      %v1888 = vpop.permute.xlu0 %1887
      %1889 = vrot.lane.b32.xlu0 %v262, 125
      %v1890 = vpop.permute.xlu0 %1889
      %1891 = vrot.lane.b32.xlu0 %v263, 125
      %v1892 = vpop.permute.xlu0 %1891
      %1893 = vrot.lane.b32.xlu0 %v264, 125
      %v1894 = vpop.permute.xlu0 %1893
      %1895 = vrot.lane.b32.xlu0 %v265, 125
      %v1896 = vpop.permute.xlu0 %1895
      %1897 = vrot.lane.b32.xlu0 %v266, 125
      %v1898 = vpop.permute.xlu0 %1897
      %v1901 = vunpack.c.l.s4 1983009808
      %v1902 = vunpack.c.0.s8 %v1901
      %v1903 = vperm.slane %v1876, %v1902
      %v1906 = vunpack.c.l.s4 1983009808
      %v1907 = vunpack.c.0.s8 %v1906
      %v1908 = vperm.slane %v1888, %v1907
      %v1909 = vrot.slane %v1908, 4
      %v1910 = vsel %vm276, %v1909, %v1903
      %v1911 = vrot.slane %v1903, 4
      %v1912 = vsel %vm276, %v1908, %v1911
      %v1914 = vunpack.c.l.s4 1934713408
      %v1915 = vunpack.c.0.s8 %v1914
      %v1916 = vperm.slane %v1910, %v1915
      %v1918 = vunpack.c.l.s4 1934713408
      %v1919 = vunpack.c.0.s8 %v1918
      %v1920 = vperm.slane %v1912, %v1919
      %v1921 = vrot.slane %v1916, 4
      %v1922 = vsel %vm276, 0, %v1921
      %v1923 = vrot.slane %v1920, 4
      %v1924 = vsel %vm276, 0, %v1923
      %v1927 = vunpack.c.l.s4 1983009808
      %v1928 = vunpack.c.0.s8 %v1927
      %v1929 = vperm.slane %v1882, %v1928
      %v1932 = vunpack.c.l.s4 1983009808
      %v1933 = vunpack.c.0.s8 %v1932
      %v1934 = vperm.slane %v1894, %v1933
      %v1935 = vrot.slane %v1934, 4
      %v1936 = vsel %vm276, %v1935, %v1929
      %v1937 = vrot.slane %v1929, 4
      %v1938 = vsel %vm276, %v1934, %v1937
      %v1940 = vunpack.c.l.s4 1934713408
      %v1941 = vunpack.c.0.s8 %v1940
      %v1942 = vperm.slane %v1936, %v1941
      %v1944 = vunpack.c.l.s4 1934713408
      %v1945 = vunpack.c.0.s8 %v1944
      %v1946 = vperm.slane %v1938, %v1945
      %v1947 = vrot.slane %v1942, 4
      %v1948 = vsel %vm276, 0, %v1947
      %v1949 = vrot.slane %v1946, 4
      %v1950 = vsel %vm276, 0, %v1949
      %v1953 = vunpack.c.l.s4 1983009808
      %v1954 = vunpack.c.0.s8 %v1953
      %v1955 = vperm.slane %v1878, %v1954
      %v1958 = vunpack.c.l.s4 1983009808
      %v1959 = vunpack.c.0.s8 %v1958
      %v1960 = vperm.slane %v1890, %v1959
      %v1961 = vrot.slane %v1960, 4
      %v1962 = vsel %vm276, %v1961, %v1955
      %v1963 = vrot.slane %v1955, 4
      %v1964 = vsel %vm276, %v1960, %v1963
      %v1966 = vunpack.c.l.s4 1934713408
      %v1967 = vunpack.c.0.s8 %v1966
      %v1968 = vperm.slane %v1962, %v1967
      %v1970 = vunpack.c.l.s4 1934713408
      %v1971 = vunpack.c.0.s8 %v1970
      %v1972 = vperm.slane %v1964, %v1971
      %v1973 = vrot.slane %v1968, 4
      %v1974 = vsel %vm276, 0, %v1973
      %v1975 = vrot.slane %v1972, 4
      %v1976 = vsel %vm276, 0, %v1975
      %v1979 = vunpack.c.l.s4 1983009808
      %v1980 = vunpack.c.0.s8 %v1979
      %v1981 = vperm.slane %v1884, %v1980
      %v1984 = vunpack.c.l.s4 1983009808
      %v1985 = vunpack.c.0.s8 %v1984
      %v1986 = vperm.slane %v1896, %v1985
      %v1987 = vrot.slane %v1986, 4
      %v1988 = vsel %vm276, %v1987, %v1981
      %v1989 = vrot.slane %v1981, 4
      %v1990 = vsel %vm276, %v1986, %v1989
      %v1992 = vunpack.c.l.s4 1934713408
      %v1993 = vunpack.c.0.s8 %v1992
      %v1994 = vperm.slane %v1988, %v1993
      %v1996 = vunpack.c.l.s4 1934713408
      %v1997 = vunpack.c.0.s8 %v1996
      %v1998 = vperm.slane %v1990, %v1997
      %v1999 = vrot.slane %v1994, 4
      %v2000 = vsel %vm276, 0, %v1999
      %v2001 = vrot.slane %v1998, 4
      %v2002 = vsel %vm276, 0, %v2001
      %v2005 = vrot.slane %v1892, 4
      %v2006 = vsel %vm276, %v2005, %v1880
      %v2008 = vunpack.c.l.s4 1934713408
      %v2009 = vunpack.c.0.s8 %v2008
      %v2010 = vperm.slane %v2006, %v2009
      %v2011 = vrot.slane %v2010, 4
      %v2012 = vsel %vm276, 0, %v2011
      %v2015 = vrot.slane %v1898, 4
      %v2016 = vsel %vm276, %v2015, %v1886
      %v2018 = vunpack.c.l.s4 1934713408
      %v2019 = vunpack.c.0.s8 %v2018
      %v2020 = vperm.slane %v2016, %v2019
      %v2021 = vrot.slane %v2020, 4
      %v2022 = vsel %vm276, 0, %v2021
      %v2025 = vpack.i.b16 %v1942, %v1916
      %v2026 = vshrl.u32 %v1916, 16
      %v2027 = vshrl.u32 %v1942, 16
      %v2028 = vpack.i.b16 %v2027, %v2026
      %v2031 = vpack.i.b16 %v1948, %v1922
      %v2032 = vshrl.u32 %v1922, 16
      %v2033 = vshrl.u32 %v1948, 16
      %v2034 = vpack.i.b16 %v2033, %v2032
      %v2037 = vpack.i.b16 %v1946, %v1920
      %v2038 = vshrl.u32 %v1920, 16
      %v2039 = vshrl.u32 %v1946, 16
      %v2040 = vpack.i.b16 %v2039, %v2038
      %v2043 = vpack.i.b16 %v1950, %v1924
      %v2044 = vshrl.u32 %v1924, 16
      %v2045 = vshrl.u32 %v1950, 16
      %v2046 = vpack.i.b16 %v2045, %v2044
      %v2049 = vpack.i.b16 %v1994, %v1968
      %v2050 = vshrl.u32 %v1968, 16
      %v2051 = vshrl.u32 %v1994, 16
      %v2052 = vpack.i.b16 %v2051, %v2050
      %v2055 = vpack.i.b16 %v2000, %v1974
      %v2056 = vshrl.u32 %v1974, 16
      %v2057 = vshrl.u32 %v2000, 16
      %v2058 = vpack.i.b16 %v2057, %v2056
      %v2061 = vpack.i.b16 %v1998, %v1972
      %v2062 = vshrl.u32 %v1972, 16
      %v2063 = vshrl.u32 %v1998, 16
      %v2064 = vpack.i.b16 %v2063, %v2062
      %v2067 = vpack.i.b16 %v2002, %v1976
      %v2068 = vshrl.u32 %v1976, 16
      %v2069 = vshrl.u32 %v2002, 16
      %v2070 = vpack.i.b16 %v2069, %v2068
      %v2073 = vpack.i.b16 %v2020, %v2010
      %v2074 = vshrl.u32 %v2010, 16
      %v2075 = vshrl.u32 %v2020, 16
      %v2076 = vpack.i.b16 %v2075, %v2074
      %v2079 = vpack.i.b16 %v2022, %v2012
      %v2080 = vshrl.u32 %v2012, 16
      %v2081 = vshrl.u32 %v2022, 16
      %v2082 = vpack.i.b16 %v2081, %v2080
      %v2083 = vunpack.c.l.b16 %v2028
      %v2084 = vpack.c.b16 %v2083, %v2083
      %2085 = vrot.lane.b32.xlu0 %v2084, 16
      %v2086 = vpop.permute.xlu0 %2085
      %v2087 = vunpack.c.l.b16 %v2031
      %v2088 = vpack.c.b16 %v2087, %v2087
      %2089 = vrot.lane.b32.xlu0 %v2088, 32
      %v2090 = vpop.permute.xlu0 %2089
      %v2091 = vunpack.c.l.b16 %v2034
      %v2092 = vpack.c.b16 %v2091, %v2091
      %2093 = vrot.lane.b32.xlu0 %v2092, 48
      %v2094 = vpop.permute.xlu0 %2093
      %v2095 = vunpack.c.l.b16 %v2037
      %v2096 = vpack.c.b16 %v2095, %v2095
      %2097 = vrot.lane.b32.xlu0 %v2096, 64
      %v2098 = vpop.permute.xlu0 %2097
      %v2099 = vunpack.c.l.b16 %v2040
      %v2100 = vpack.c.b16 %v2099, %v2099
      %2101 = vrot.lane.b32.xlu0 %v2100, 80
      %v2102 = vpop.permute.xlu0 %2101
      %v2103 = vunpack.c.l.b16 %v2043
      %v2104 = vpack.c.b16 %v2103, %v2103
      %2105 = vrot.lane.b32.xlu0 %v2104, 96
      %v2106 = vpop.permute.xlu0 %2105
      %v2107 = vunpack.c.l.b16 %v2046
      %v2108 = vpack.c.b16 %v2107, %v2107
      %2109 = vrot.lane.b32.xlu0 %v2108, 112
      %v2110 = vpop.permute.xlu0 %2109
      %v2111 = vunpack.c.l.b16 %v2052
      %v2112 = vpack.c.b16 %v2111, %v2111
      %2113 = vrot.lane.b32.xlu0 %v2112, 16
      %v2114 = vpop.permute.xlu0 %2113
      %v2115 = vunpack.c.l.b16 %v2055
      %v2116 = vpack.c.b16 %v2115, %v2115
      %2117 = vrot.lane.b32.xlu0 %v2116, 32
      %v2118 = vpop.permute.xlu0 %2117
      %v2119 = vunpack.c.l.b16 %v2058
      %v2120 = vpack.c.b16 %v2119, %v2119
      %2121 = vrot.lane.b32.xlu0 %v2120, 48
      %v2122 = vpop.permute.xlu0 %2121
      %v2123 = vunpack.c.l.b16 %v2061
      %v2124 = vpack.c.b16 %v2123, %v2123
      %2125 = vrot.lane.b32.xlu0 %v2124, 64
      %v2126 = vpop.permute.xlu0 %2125
      %v2127 = vunpack.c.l.b16 %v2064
      %v2128 = vpack.c.b16 %v2127, %v2127
      %2129 = vrot.lane.b32.xlu0 %v2128, 80
      %v2130 = vpop.permute.xlu0 %2129
      %v2131 = vunpack.c.l.b16 %v2067
      %v2132 = vpack.c.b16 %v2131, %v2131
      %2133 = vrot.lane.b32.xlu0 %v2132, 96
      %v2134 = vpop.permute.xlu0 %2133
      %v2135 = vunpack.c.l.b16 %v2070
      %v2136 = vpack.c.b16 %v2135, %v2135
      %2137 = vrot.lane.b32.xlu0 %v2136, 112
      %v2138 = vpop.permute.xlu0 %2137
      %v2139 = vunpack.c.l.b16 %v2076
      %v2140 = vpack.c.b16 %v2139, %v2139
      %2141 = vrot.lane.b32.xlu0 %v2140, 16
      %v2142 = vpop.permute.xlu0 %2141
      %v2143 = vunpack.c.l.b16 %v2079
      %v2144 = vpack.c.b16 %v2143, %v2143
      %2145 = vrot.lane.b32.xlu0 %v2144, 32
      %v2146 = vpop.permute.xlu0 %2145
      %v2147 = vunpack.c.l.b16 %v2082
      %v2148 = vpack.c.b16 %v2147, %v2147
      %2149 = vrot.lane.b32.xlu0 %v2148, 48
      %v2150 = vpop.permute.xlu0 %2149
      %v2153 = vsel %vm508, %v2025, %v2086
      %v2155 = vsel %vm512, %v2153, %v2090
      %v2157 = vsel %vm515, %v2155, %v2094
      %v2159 = vsel %vm518, %v2157, %v2098
      %v2161 = vsel %vm521, %v2159, %v2102
      %v2163 = vsel %vm524, %v2161, %v2106
      %v2165 = vsel %vm527, %v2163, %v2110
      %v2168 = vsel %vm508, %v2049, %v2114
      %v2170 = vsel %vm512, %v2168, %v2118
      %v2172 = vsel %vm515, %v2170, %v2122
      %v2174 = vsel %vm518, %v2172, %v2126
      %v2176 = vsel %vm521, %v2174, %v2130
      %v2178 = vsel %vm524, %v2176, %v2134
      %v2180 = vsel %vm527, %v2178, %v2138
      %v2183 = vsel %vm508, %v2073, %v2142
      %v2185 = vsel %vm512, %v2183, %v2146
      %v2187 = vsel %vm515, %v2185, %v2150
      %s2188 = scalar_lea.vmem %s236, 12
      %v2189 = vld [vmem:[%s2188] sm:$0xf]
      %v2191 = vsel %vm567, %v2189, 0
      %v2193 = vsel %vm571, %v2165, 0
      %v2195 = vsel %vm571, %v2180, 0
      %2197 = vmatpush.bf16.msra.mxu0 0
      %2198 = vmatpush.bf16.msra.mxu0 0
      %2199 = vmatpush.bf16.msra.mxu0 0
      %2200 = vmatpush.bf16.msra.mxu0 0
      %2201 = vmatpush.bf16.msra.mxu0 0
      %2202 = vmatpush.bf16.msra.mxu0 0
      %2203 = vmatpush.bf16.msra.mxu0 0
      %2204 = vmatpush.bf16.msra.mxu0 %v2193
      %2205 = vmatmul.bf16.gmra.mxu0 %v2191
      %v2206 = vpop.f32.mrf.mxu0
      %v2207 = vadd.f32 0.0, %v2206
      %v2208 = vpop.f32.mrf.mxu0
      %2209 = vdwg.mxu0
      %2210 = vmatpush.bf16.msra.mxu0 0
      %2211 = vmatpush.bf16.msra.mxu0 0
      %2212 = vmatpush.bf16.msra.mxu0 0
      %2213 = vmatpush.bf16.msra.mxu0 0
      %2214 = vmatpush.bf16.msra.mxu0 0
      %2215 = vmatpush.bf16.msra.mxu0 0
      %2216 = vmatpush.bf16.msra.mxu0 0
      %2217 = vmatpush.bf16.msra.mxu0 %v2195
      %2218 = vmatmul.bf16.gmra.mxu0 %v2191
      %v2219 = vpop.f32.mrf.mxu0
      %v2220 = vadd.f32 0.0, %v2219
      %v2221 = vpop.f32.mrf.mxu0
      %2222 = vdwg.mxu0
      %v2223 = vadd.f32 %v1873, %v2207
      %v2224 = vadd.f32 %v1874, %v2220
      %s2225 = scalar_lea.vmem %s236, 32
      %v2226 = vld [vmem:[%s2225] sm:$0xf]
      %2230 = vrot.lane.b32.xlu0 %v2165, 112
      %v2231 = vpop.permute.xlu0 %2230
      %2232 = vrot.lane.b32.xlu0 %v2180, 112
      %v2233 = vpop.permute.xlu0 %2232
      %2234 = vrot.lane.b32.xlu0 %v2187, 112
      %v2235 = vpop.permute.xlu0 %2234
      %v2236 = vsel %vm564, %v2231, %v2233
      %v2237 = vsel %vm564, %v2233, %v2235
      %v2239 = vsel %vm567, %v2226, 0
      %v2242 = vsel %vm571, %v2236, 0
      %v2245 = vsel %vm571, %v2237, 0
      %2247 = vmatpush.bf16.msra.mxu0 0
      %2248 = vmatpush.bf16.msra.mxu0 0
      %2249 = vmatpush.bf16.msra.mxu0 0
      %2250 = vmatpush.bf16.msra.mxu0 0
      %2251 = vmatpush.bf16.msra.mxu0 0
      %2252 = vmatpush.bf16.msra.mxu0 0
      %2253 = vmatpush.bf16.msra.mxu0 0
      %2254 = vmatpush.bf16.msra.mxu0 %v2242
      %2255 = vmatmul.bf16.gmra.mxu0 %v2239
      %v2256 = vpop.f32.mrf.mxu0
      %v2257 = vadd.f32 0.0, %v2256
      %v2258 = vpop.f32.mrf.mxu0
      %2259 = vdwg.mxu0
      %2260 = vmatpush.bf16.msra.mxu0 0
      %2261 = vmatpush.bf16.msra.mxu0 0
      %2262 = vmatpush.bf16.msra.mxu0 0
      %2263 = vmatpush.bf16.msra.mxu0 0
      %2264 = vmatpush.bf16.msra.mxu0 0
      %2265 = vmatpush.bf16.msra.mxu0 0
      %2266 = vmatpush.bf16.msra.mxu0 0
      %2267 = vmatpush.bf16.msra.mxu0 %v2245
      %2268 = vmatmul.bf16.gmra.mxu0 %v2239
      %v2269 = vpop.f32.mrf.mxu0
      %v2270 = vadd.f32 0.0, %v2269
      %v2271 = vpop.f32.mrf.mxu0
      %2272 = vdwg.mxu0
      %v2273 = vadd.f32 %v2223, %v2257
      %v2274 = vadd.f32 %v2224, %v2270
      %s2275 = scalar_lea.vmem %s236, 52
      %v2276 = vld [vmem:[%s2275] sm:$0xf]
      %2277 = vrot.lane.b32.xlu0 %v2165, 96
      %v2278 = vpop.permute.xlu0 %2277
      %2279 = vrot.lane.b32.xlu0 %v2180, 96
      %v2280 = vpop.permute.xlu0 %2279
      %2281 = vrot.lane.b32.xlu0 %v2187, 96
      %v2282 = vpop.permute.xlu0 %2281
      %v2283 = vsel %vm645, %v2278, %v2280
      %v2284 = vsel %vm645, %v2280, %v2282
      %v2286 = vsel %vm567, %v2276, 0
      %v2289 = vsel %vm571, %v2283, 0
      %v2292 = vsel %vm571, %v2284, 0
      %2294 = vmatpush.bf16.msra.mxu0 0
      %2295 = vmatpush.bf16.msra.mxu0 0
      %2296 = vmatpush.bf16.msra.mxu0 0
      %2297 = vmatpush.bf16.msra.mxu0 0
      %2298 = vmatpush.bf16.msra.mxu0 0
      %2299 = vmatpush.bf16.msra.mxu0 0
      %2300 = vmatpush.bf16.msra.mxu0 0
      %2301 = vmatpush.bf16.msra.mxu0 %v2289
      %2302 = vmatmul.bf16.gmra.mxu0 %v2286
      %v2303 = vpop.f32.mrf.mxu0
      %v2304 = vadd.f32 0.0, %v2303
      %v2305 = vpop.f32.mrf.mxu0
      %2306 = vdwg.mxu0
      %2307 = vmatpush.bf16.msra.mxu0 0
      %2308 = vmatpush.bf16.msra.mxu0 0
      %2309 = vmatpush.bf16.msra.mxu0 0
      %2310 = vmatpush.bf16.msra.mxu0 0
      %2311 = vmatpush.bf16.msra.mxu0 0
      %2312 = vmatpush.bf16.msra.mxu0 0
      %2313 = vmatpush.bf16.msra.mxu0 0
      %2314 = vmatpush.bf16.msra.mxu0 %v2292
      %2315 = vmatmul.bf16.gmra.mxu0 %v2286
      %v2316 = vpop.f32.mrf.mxu0
      %v2317 = vadd.f32 0.0, %v2316
      %v2318 = vpop.f32.mrf.mxu0
      %2319 = vdwg.mxu0
      %v2320 = vadd.f32 %v2273, %v2304
      %v2321 = vadd.f32 %v2274, %v2317
      %s2322 = scalar_lea.vmem %s236, 72
      %v2323 = vld [vmem:[%s2322] sm:$0xf]
      %2324 = vrot.lane.b32.xlu0 %v2165, 80
      %v2325 = vpop.permute.xlu0 %2324
      %2326 = vrot.lane.b32.xlu0 %v2180, 80
      %v2327 = vpop.permute.xlu0 %2326
      %2328 = vrot.lane.b32.xlu0 %v2187, 80
      %v2329 = vpop.permute.xlu0 %2328
      %v2330 = vsel %vm693, %v2325, %v2327
      %v2331 = vsel %vm693, %v2327, %v2329
      %v2333 = vsel %vm567, %v2323, 0
      %v2336 = vsel %vm571, %v2330, 0
      %v2339 = vsel %vm571, %v2331, 0
      %2341 = vmatpush.bf16.msra.mxu0 0
      %2342 = vmatpush.bf16.msra.mxu0 0
      %2343 = vmatpush.bf16.msra.mxu0 0
      %2344 = vmatpush.bf16.msra.mxu0 0
      %2345 = vmatpush.bf16.msra.mxu0 0
      %2346 = vmatpush.bf16.msra.mxu0 0
      %2347 = vmatpush.bf16.msra.mxu0 0
      %2348 = vmatpush.bf16.msra.mxu0 %v2336
      %2349 = vmatmul.bf16.gmra.mxu0 %v2333
      %v2350 = vpop.f32.mrf.mxu0
      %v2351 = vadd.f32 0.0, %v2350
      %v2352 = vpop.f32.mrf.mxu0
      %2353 = vdwg.mxu0
      %2354 = vmatpush.bf16.msra.mxu0 0
      %2355 = vmatpush.bf16.msra.mxu0 0
      %2356 = vmatpush.bf16.msra.mxu0 0
      %2357 = vmatpush.bf16.msra.mxu0 0
      %2358 = vmatpush.bf16.msra.mxu0 0
      %2359 = vmatpush.bf16.msra.mxu0 0
      %2360 = vmatpush.bf16.msra.mxu0 0
      %2361 = vmatpush.bf16.msra.mxu0 %v2339
      %2362 = vmatmul.bf16.gmra.mxu0 %v2333
      %v2363 = vpop.f32.mrf.mxu0
      %v2364 = vadd.f32 0.0, %v2363
      %v2365 = vpop.f32.mrf.mxu0
      %2366 = vdwg.mxu0
      %v2367 = vadd.f32 %v2320, %v2351
      %v2368 = vadd.f32 %v2321, %v2364
      %s2369 = scalar_lea.vmem %s236, 92
      %v2370 = vld [vmem:[%s2369] sm:$0xf]
      %2371 = vrot.lane.b32.xlu0 %v2165, 64
      %v2372 = vpop.permute.xlu0 %2371
      %2373 = vrot.lane.b32.xlu0 %v2180, 64
      %v2374 = vpop.permute.xlu0 %2373
      %2375 = vrot.lane.b32.xlu0 %v2187, 64
      %v2376 = vpop.permute.xlu0 %2375
      %v2377 = vsel %vm741, %v2372, %v2374
      %v2378 = vsel %vm741, %v2374, %v2376
      %v2380 = vsel %vm567, %v2370, 0
      %v2383 = vsel %vm571, %v2377, 0
      %v2386 = vsel %vm571, %v2378, 0
      %2388 = vmatpush.bf16.msra.mxu0 0
      %2389 = vmatpush.bf16.msra.mxu0 0
      %2390 = vmatpush.bf16.msra.mxu0 0
      %2391 = vmatpush.bf16.msra.mxu0 0
      %2392 = vmatpush.bf16.msra.mxu0 0
      %2393 = vmatpush.bf16.msra.mxu0 0
      %2394 = vmatpush.bf16.msra.mxu0 0
      %2395 = vmatpush.bf16.msra.mxu0 %v2383
      %2396 = vmatmul.bf16.gmra.mxu0 %v2380
      %v2397 = vpop.f32.mrf.mxu0
      %v2398 = vadd.f32 0.0, %v2397
      %v2399 = vpop.f32.mrf.mxu0
      %2400 = vdwg.mxu0
      %2401 = vmatpush.bf16.msra.mxu0 0
      %2402 = vmatpush.bf16.msra.mxu0 0
      %2403 = vmatpush.bf16.msra.mxu0 0
      %2404 = vmatpush.bf16.msra.mxu0 0
      %2405 = vmatpush.bf16.msra.mxu0 0
      %2406 = vmatpush.bf16.msra.mxu0 0
      %2407 = vmatpush.bf16.msra.mxu0 0
      %2408 = vmatpush.bf16.msra.mxu0 %v2386
      %2409 = vmatmul.bf16.gmra.mxu0 %v2380
      %v2410 = vpop.f32.mrf.mxu0
      %v2411 = vadd.f32 0.0, %v2410
      %v2412 = vpop.f32.mrf.mxu0
      %2413 = vdwg.mxu0
      %v2414 = vadd.f32 %v2367, %v2398
      %v2415 = vadd.f32 %v2368, %v2411
      %2416 = vrot.lane.b32.xlu0 %v255, 124
      %v2417 = vpop.permute.xlu0 %2416
      %2418 = vrot.lane.b32.xlu0 %v256, 124
      %v2419 = vpop.permute.xlu0 %2418
      %2420 = vrot.lane.b32.xlu0 %v257, 124
      %v2421 = vpop.permute.xlu0 %2420
      %2422 = vrot.lane.b32.xlu0 %v258, 124
      %v2423 = vpop.permute.xlu0 %2422
      %2424 = vrot.lane.b32.xlu0 %v259, 124
      %v2425 = vpop.permute.xlu0 %2424
      %2426 = vrot.lane.b32.xlu0 %v260, 124
      %v2427 = vpop.permute.xlu0 %2426
      %2428 = vrot.lane.b32.xlu0 %v261, 124
      %v2429 = vpop.permute.xlu0 %2428
      %2430 = vrot.lane.b32.xlu0 %v262, 124
      %v2431 = vpop.permute.xlu0 %2430
      %2432 = vrot.lane.b32.xlu0 %v263, 124
      %v2433 = vpop.permute.xlu0 %2432
      %2434 = vrot.lane.b32.xlu0 %v264, 124
      %v2435 = vpop.permute.xlu0 %2434
      %2436 = vrot.lane.b32.xlu0 %v265, 124
      %v2437 = vpop.permute.xlu0 %2436
      %2438 = vrot.lane.b32.xlu0 %v266, 124
      %v2439 = vpop.permute.xlu0 %2438
      %v2442 = vunpack.c.l.s4 1983009808
      %v2443 = vunpack.c.0.s8 %v2442
      %v2444 = vperm.slane %v2417, %v2443
      %v2447 = vunpack.c.l.s4 1983009808
      %v2448 = vunpack.c.0.s8 %v2447
      %v2449 = vperm.slane %v2429, %v2448
      %v2450 = vrot.slane %v2449, 4
      %v2451 = vsel %vm276, %v2450, %v2444
      %v2452 = vrot.slane %v2444, 4
      %v2453 = vsel %vm276, %v2449, %v2452
      %v2455 = vunpack.c.l.s4 1934713408
      %v2456 = vunpack.c.0.s8 %v2455
      %v2457 = vperm.slane %v2451, %v2456
      %v2459 = vunpack.c.l.s4 1934713408
      %v2460 = vunpack.c.0.s8 %v2459
      %v2461 = vperm.slane %v2453, %v2460
      %v2462 = vrot.slane %v2457, 4
      %v2463 = vsel %vm276, 0, %v2462
      %v2464 = vrot.slane %v2461, 4
      %v2465 = vsel %vm276, 0, %v2464
      %v2468 = vunpack.c.l.s4 1983009808
      %v2469 = vunpack.c.0.s8 %v2468
      %v2470 = vperm.slane %v2423, %v2469
      %v2473 = vunpack.c.l.s4 1983009808
      %v2474 = vunpack.c.0.s8 %v2473
      %v2475 = vperm.slane %v2435, %v2474
      %v2476 = vrot.slane %v2475, 4
      %v2477 = vsel %vm276, %v2476, %v2470
      %v2478 = vrot.slane %v2470, 4
      %v2479 = vsel %vm276, %v2475, %v2478
      %v2481 = vunpack.c.l.s4 1934713408
      %v2482 = vunpack.c.0.s8 %v2481
      %v2483 = vperm.slane %v2477, %v2482
      %v2485 = vunpack.c.l.s4 1934713408
      %v2486 = vunpack.c.0.s8 %v2485
      %v2487 = vperm.slane %v2479, %v2486
      %v2488 = vrot.slane %v2483, 4
      %v2489 = vsel %vm276, 0, %v2488
      %v2490 = vrot.slane %v2487, 4
      %v2491 = vsel %vm276, 0, %v2490
      %v2494 = vunpack.c.l.s4 1983009808
      %v2495 = vunpack.c.0.s8 %v2494
      %v2496 = vperm.slane %v2419, %v2495
      %v2499 = vunpack.c.l.s4 1983009808
      %v2500 = vunpack.c.0.s8 %v2499
      %v2501 = vperm.slane %v2431, %v2500
      %v2502 = vrot.slane %v2501, 4
      %v2503 = vsel %vm276, %v2502, %v2496
      %v2504 = vrot.slane %v2496, 4
      %v2505 = vsel %vm276, %v2501, %v2504
      %v2507 = vunpack.c.l.s4 1934713408
      %v2508 = vunpack.c.0.s8 %v2507
      %v2509 = vperm.slane %v2503, %v2508
      %v2511 = vunpack.c.l.s4 1934713408
      %v2512 = vunpack.c.0.s8 %v2511
      %v2513 = vperm.slane %v2505, %v2512
      %v2514 = vrot.slane %v2509, 4
      %v2515 = vsel %vm276, 0, %v2514
      %v2516 = vrot.slane %v2513, 4
      %v2517 = vsel %vm276, 0, %v2516
      %v2520 = vunpack.c.l.s4 1983009808
      %v2521 = vunpack.c.0.s8 %v2520
      %v2522 = vperm.slane %v2425, %v2521
      %v2525 = vunpack.c.l.s4 1983009808
      %v2526 = vunpack.c.0.s8 %v2525
      %v2527 = vperm.slane %v2437, %v2526
      %v2528 = vrot.slane %v2527, 4
      %v2529 = vsel %vm276, %v2528, %v2522
      %v2530 = vrot.slane %v2522, 4
      %v2531 = vsel %vm276, %v2527, %v2530
      %v2533 = vunpack.c.l.s4 1934713408
      %v2534 = vunpack.c.0.s8 %v2533
      %v2535 = vperm.slane %v2529, %v2534
      %v2537 = vunpack.c.l.s4 1934713408
      %v2538 = vunpack.c.0.s8 %v2537
      %v2539 = vperm.slane %v2531, %v2538
      %v2540 = vrot.slane %v2535, 4
      %v2541 = vsel %vm276, 0, %v2540
      %v2542 = vrot.slane %v2539, 4
      %v2543 = vsel %vm276, 0, %v2542
      %v2546 = vrot.slane %v2433, 4
      %v2547 = vsel %vm276, %v2546, %v2421
      %v2549 = vunpack.c.l.s4 1934713408
      %v2550 = vunpack.c.0.s8 %v2549
      %v2551 = vperm.slane %v2547, %v2550
      %v2552 = vrot.slane %v2551, 4
      %v2553 = vsel %vm276, 0, %v2552
      %v2556 = vrot.slane %v2439, 4
      %v2557 = vsel %vm276, %v2556, %v2427
      %v2559 = vunpack.c.l.s4 1934713408
      %v2560 = vunpack.c.0.s8 %v2559
      %v2561 = vperm.slane %v2557, %v2560
      %v2562 = vrot.slane %v2561, 4
      %v2563 = vsel %vm276, 0, %v2562
      %v2566 = vpack.i.b16 %v2483, %v2457
      %v2567 = vshrl.u32 %v2457, 16
      %v2568 = vshrl.u32 %v2483, 16
      %v2569 = vpack.i.b16 %v2568, %v2567
      %v2572 = vpack.i.b16 %v2489, %v2463
      %v2573 = vshrl.u32 %v2463, 16
      %v2574 = vshrl.u32 %v2489, 16
      %v2575 = vpack.i.b16 %v2574, %v2573
      %v2578 = vpack.i.b16 %v2487, %v2461
      %v2579 = vshrl.u32 %v2461, 16
      %v2580 = vshrl.u32 %v2487, 16
      %v2581 = vpack.i.b16 %v2580, %v2579
      %v2584 = vpack.i.b16 %v2491, %v2465
      %v2585 = vshrl.u32 %v2465, 16
      %v2586 = vshrl.u32 %v2491, 16
      %v2587 = vpack.i.b16 %v2586, %v2585
      %v2590 = vpack.i.b16 %v2535, %v2509
      %v2591 = vshrl.u32 %v2509, 16
      %v2592 = vshrl.u32 %v2535, 16
      %v2593 = vpack.i.b16 %v2592, %v2591
      %v2596 = vpack.i.b16 %v2541, %v2515
      %v2597 = vshrl.u32 %v2515, 16
      %v2598 = vshrl.u32 %v2541, 16
      %v2599 = vpack.i.b16 %v2598, %v2597
      %v2602 = vpack.i.b16 %v2539, %v2513
      %v2603 = vshrl.u32 %v2513, 16
      %v2604 = vshrl.u32 %v2539, 16
      %v2605 = vpack.i.b16 %v2604, %v2603
      %v2608 = vpack.i.b16 %v2543, %v2517
      %v2609 = vshrl.u32 %v2517, 16
      %v2610 = vshrl.u32 %v2543, 16
      %v2611 = vpack.i.b16 %v2610, %v2609
      %v2614 = vpack.i.b16 %v2561, %v2551
      %v2615 = vshrl.u32 %v2551, 16
      %v2616 = vshrl.u32 %v2561, 16
      %v2617 = vpack.i.b16 %v2616, %v2615
      %v2620 = vpack.i.b16 %v2563, %v2553
      %v2621 = vshrl.u32 %v2553, 16
      %v2622 = vshrl.u32 %v2563, 16
      %v2623 = vpack.i.b16 %v2622, %v2621
      %v2624 = vunpack.c.l.b16 %v2569
      %v2625 = vpack.c.b16 %v2624, %v2624
      %2626 = vrot.lane.b32.xlu0 %v2625, 16
      %v2627 = vpop.permute.xlu0 %2626
      %v2628 = vunpack.c.l.b16 %v2572
      %v2629 = vpack.c.b16 %v2628, %v2628
      %2630 = vrot.lane.b32.xlu0 %v2629, 32
      %v2631 = vpop.permute.xlu0 %2630
      %v2632 = vunpack.c.l.b16 %v2575
      %v2633 = vpack.c.b16 %v2632, %v2632
      %2634 = vrot.lane.b32.xlu0 %v2633, 48
      %v2635 = vpop.permute.xlu0 %2634
      %v2636 = vunpack.c.l.b16 %v2578
      %v2637 = vpack.c.b16 %v2636, %v2636
      %2638 = vrot.lane.b32.xlu0 %v2637, 64
      %v2639 = vpop.permute.xlu0 %2638
      %v2640 = vunpack.c.l.b16 %v2581
      %v2641 = vpack.c.b16 %v2640, %v2640
      %2642 = vrot.lane.b32.xlu0 %v2641, 80
      %v2643 = vpop.permute.xlu0 %2642
      %v2644 = vunpack.c.l.b16 %v2584
      %v2645 = vpack.c.b16 %v2644, %v2644
      %2646 = vrot.lane.b32.xlu0 %v2645, 96
      %v2647 = vpop.permute.xlu0 %2646
      %v2648 = vunpack.c.l.b16 %v2587
      %v2649 = vpack.c.b16 %v2648, %v2648
      %2650 = vrot.lane.b32.xlu0 %v2649, 112
      %v2651 = vpop.permute.xlu0 %2650
      %v2652 = vunpack.c.l.b16 %v2593
      %v2653 = vpack.c.b16 %v2652, %v2652
      %2654 = vrot.lane.b32.xlu0 %v2653, 16
      %v2655 = vpop.permute.xlu0 %2654
      %v2656 = vunpack.c.l.b16 %v2596
      %v2657 = vpack.c.b16 %v2656, %v2656
      %2658 = vrot.lane.b32.xlu0 %v2657, 32
      %v2659 = vpop.permute.xlu0 %2658
      %v2660 = vunpack.c.l.b16 %v2599
      %v2661 = vpack.c.b16 %v2660, %v2660
      %2662 = vrot.lane.b32.xlu0 %v2661, 48
      %v2663 = vpop.permute.xlu0 %2662
      %v2664 = vunpack.c.l.b16 %v2602
      %v2665 = vpack.c.b16 %v2664, %v2664
      %2666 = vrot.lane.b32.xlu0 %v2665, 64
      %v2667 = vpop.permute.xlu0 %2666
      %v2668 = vunpack.c.l.b16 %v2605
      %v2669 = vpack.c.b16 %v2668, %v2668
      %2670 = vrot.lane.b32.xlu0 %v2669, 80
      %v2671 = vpop.permute.xlu0 %2670
      %v2672 = vunpack.c.l.b16 %v2608
      %v2673 = vpack.c.b16 %v2672, %v2672
      %2674 = vrot.lane.b32.xlu0 %v2673, 96
      %v2675 = vpop.permute.xlu0 %2674
      %v2676 = vunpack.c.l.b16 %v2611
      %v2677 = vpack.c.b16 %v2676, %v2676
      %2678 = vrot.lane.b32.xlu0 %v2677, 112
      %v2679 = vpop.permute.xlu0 %2678
      %v2680 = vunpack.c.l.b16 %v2617
      %v2681 = vpack.c.b16 %v2680, %v2680
      %2682 = vrot.lane.b32.xlu0 %v2681, 16
      %v2683 = vpop.permute.xlu0 %2682
      %v2684 = vunpack.c.l.b16 %v2620
      %v2685 = vpack.c.b16 %v2684, %v2684
      %2686 = vrot.lane.b32.xlu0 %v2685, 32
      %v2687 = vpop.permute.xlu0 %2686
      %v2688 = vunpack.c.l.b16 %v2623
      %v2689 = vpack.c.b16 %v2688, %v2688
      %2690 = vrot.lane.b32.xlu0 %v2689, 48
      %v2691 = vpop.permute.xlu0 %2690
      %v2694 = vsel %vm508, %v2566, %v2627
      %v2696 = vsel %vm512, %v2694, %v2631
      %v2698 = vsel %vm515, %v2696, %v2635
      %v2700 = vsel %vm518, %v2698, %v2639
      %v2702 = vsel %vm521, %v2700, %v2643
      %v2704 = vsel %vm524, %v2702, %v2647
      %v2706 = vsel %vm527, %v2704, %v2651
      %v2709 = vsel %vm508, %v2590, %v2655
      %v2711 = vsel %vm512, %v2709, %v2659
      %v2713 = vsel %vm515, %v2711, %v2663
      %v2715 = vsel %vm518, %v2713, %v2667
      %v2717 = vsel %vm521, %v2715, %v2671
      %v2719 = vsel %vm524, %v2717, %v2675
      %v2721 = vsel %vm527, %v2719, %v2679
      %v2724 = vsel %vm508, %v2614, %v2683
      %v2726 = vsel %vm512, %v2724, %v2687
      %v2728 = vsel %vm515, %v2726, %v2691
      %s2729 = scalar_lea.vmem %s236, 16
      %v2730 = vld [vmem:[%s2729] sm:$0xf]
      %v2732 = vsel %vm567, %v2730, 0
      %v2734 = vsel %vm571, %v2706, 0
      %v2736 = vsel %vm571, %v2721, 0
      %2738 = vmatpush.bf16.msra.mxu0 0
      %2739 = vmatpush.bf16.msra.mxu0 0
      %2740 = vmatpush.bf16.msra.mxu0 0
      %2741 = vmatpush.bf16.msra.mxu0 0
      %2742 = vmatpush.bf16.msra.mxu0 0
      %2743 = vmatpush.bf16.msra.mxu0 0
      %2744 = vmatpush.bf16.msra.mxu0 0
      %2745 = vmatpush.bf16.msra.mxu0 %v2734
      %2746 = vmatmul.bf16.gmra.mxu0 %v2732
      %v2747 = vpop.f32.mrf.mxu0
      %v2748 = vadd.f32 0.0, %v2747
      %v2749 = vpop.f32.mrf.mxu0
      %2750 = vdwg.mxu0
      %2751 = vmatpush.bf16.msra.mxu0 0
      %2752 = vmatpush.bf16.msra.mxu0 0
      %2753 = vmatpush.bf16.msra.mxu0 0
      %2754 = vmatpush.bf16.msra.mxu0 0
      %2755 = vmatpush.bf16.msra.mxu0 0
      %2756 = vmatpush.bf16.msra.mxu0 0
      %2757 = vmatpush.bf16.msra.mxu0 0
      %2758 = vmatpush.bf16.msra.mxu0 %v2736
      %2759 = vmatmul.bf16.gmra.mxu0 %v2732
      %v2760 = vpop.f32.mrf.mxu0
      %v2761 = vadd.f32 0.0, %v2760
      %v2762 = vpop.f32.mrf.mxu0
      %2763 = vdwg.mxu0
      %v2764 = vadd.f32 %v2414, %v2748
      %v2765 = vadd.f32 %v2415, %v2761
      %s2766 = scalar_lea.vmem %s236, 36
      %v2767 = vld [vmem:[%s2766] sm:$0xf]
      %2771 = vrot.lane.b32.xlu0 %v2706, 112
      %v2772 = vpop.permute.xlu0 %2771
      %2773 = vrot.lane.b32.xlu0 %v2721, 112
      %v2774 = vpop.permute.xlu0 %2773
      %2775 = vrot.lane.b32.xlu0 %v2728, 112
      %v2776 = vpop.permute.xlu0 %2775
      %v2777 = vsel %vm564, %v2772, %v2774
      %v2778 = vsel %vm564, %v2774, %v2776
      %v2780 = vsel %vm567, %v2767, 0
      %v2783 = vsel %vm571, %v2777, 0
      %v2786 = vsel %vm571, %v2778, 0
      %2788 = vmatpush.bf16.msra.mxu0 0
      %2789 = vmatpush.bf16.msra.mxu0 0
      %2790 = vmatpush.bf16.msra.mxu0 0
      %2791 = vmatpush.bf16.msra.mxu0 0
      %2792 = vmatpush.bf16.msra.mxu0 0
      %2793 = vmatpush.bf16.msra.mxu0 0
      %2794 = vmatpush.bf16.msra.mxu0 0
      %2795 = vmatpush.bf16.msra.mxu0 %v2783
      %2796 = vmatmul.bf16.gmra.mxu0 %v2780
      %v2797 = vpop.f32.mrf.mxu0
      %v2798 = vadd.f32 0.0, %v2797
      %v2799 = vpop.f32.mrf.mxu0
      %2800 = vdwg.mxu0
      %2801 = vmatpush.bf16.msra.mxu0 0
      %2802 = vmatpush.bf16.msra.mxu0 0
      %2803 = vmatpush.bf16.msra.mxu0 0
      %2804 = vmatpush.bf16.msra.mxu0 0
      %2805 = vmatpush.bf16.msra.mxu0 0
      %2806 = vmatpush.bf16.msra.mxu0 0
      %2807 = vmatpush.bf16.msra.mxu0 0
      %2808 = vmatpush.bf16.msra.mxu0 %v2786
      %2809 = vmatmul.bf16.gmra.mxu0 %v2780
      %v2810 = vpop.f32.mrf.mxu0
      %v2811 = vadd.f32 0.0, %v2810
      %v2812 = vpop.f32.mrf.mxu0
      %2813 = vdwg.mxu0
      %v2814 = vadd.f32 %v2764, %v2798
      %v2815 = vadd.f32 %v2765, %v2811
      %s2816 = scalar_lea.vmem %s236, 56
      %v2817 = vld [vmem:[%s2816] sm:$0xf]
      %2818 = vrot.lane.b32.xlu0 %v2706, 96
      %v2819 = vpop.permute.xlu0 %2818
      %2820 = vrot.lane.b32.xlu0 %v2721, 96
      %v2821 = vpop.permute.xlu0 %2820
      %2822 = vrot.lane.b32.xlu0 %v2728, 96
      %v2823 = vpop.permute.xlu0 %2822
      %v2824 = vsel %vm645, %v2819, %v2821
      %v2825 = vsel %vm645, %v2821, %v2823
      %v2827 = vsel %vm567, %v2817, 0
      %v2830 = vsel %vm571, %v2824, 0
      %v2833 = vsel %vm571, %v2825, 0
      %2835 = vmatpush.bf16.msra.mxu0 0
      %2836 = vmatpush.bf16.msra.mxu0 0
      %2837 = vmatpush.bf16.msra.mxu0 0
      %2838 = vmatpush.bf16.msra.mxu0 0
      %2839 = vmatpush.bf16.msra.mxu0 0
      %2840 = vmatpush.bf16.msra.mxu0 0
      %2841 = vmatpush.bf16.msra.mxu0 0
      %2842 = vmatpush.bf16.msra.mxu0 %v2830
      %2843 = vmatmul.bf16.gmra.mxu0 %v2827
      %v2844 = vpop.f32.mrf.mxu0
      %v2845 = vadd.f32 0.0, %v2844
      %v2846 = vpop.f32.mrf.mxu0
      %2847 = vdwg.mxu0
      %2848 = vmatpush.bf16.msra.mxu0 0
      %2849 = vmatpush.bf16.msra.mxu0 0
      %2850 = vmatpush.bf16.msra.mxu0 0
      %2851 = vmatpush.bf16.msra.mxu0 0
      %2852 = vmatpush.bf16.msra.mxu0 0
      %2853 = vmatpush.bf16.msra.mxu0 0
      %2854 = vmatpush.bf16.msra.mxu0 0
      %2855 = vmatpush.bf16.msra.mxu0 %v2833
      %2856 = vmatmul.bf16.gmra.mxu0 %v2827
      %v2857 = vpop.f32.mrf.mxu0
      %v2858 = vadd.f32 0.0, %v2857
      %v2859 = vpop.f32.mrf.mxu0
      %2860 = vdwg.mxu0
      %v2861 = vadd.f32 %v2814, %v2845
      %v2862 = vadd.f32 %v2815, %v2858
      %s2863 = scalar_lea.vmem %s236, 76
      %v2864 = vld [vmem:[%s2863] sm:$0xf]
      %2865 = vrot.lane.b32.xlu0 %v2706, 80
      %v2866 = vpop.permute.xlu0 %2865
      %2867 = vrot.lane.b32.xlu0 %v2721, 80
      %v2868 = vpop.permute.xlu0 %2867
      %2869 = vrot.lane.b32.xlu0 %v2728, 80
      %v2870 = vpop.permute.xlu0 %2869
      %v2871 = vsel %vm693, %v2866, %v2868
      %v2872 = vsel %vm693, %v2868, %v2870
      %v2874 = vsel %vm567, %v2864, 0
      %v2877 = vsel %vm571, %v2871, 0
      %v2880 = vsel %vm571, %v2872, 0
      %2882 = vmatpush.bf16.msra.mxu0 0
      %2883 = vmatpush.bf16.msra.mxu0 0
      %2884 = vmatpush.bf16.msra.mxu0 0
      %2885 = vmatpush.bf16.msra.mxu0 0
      %2886 = vmatpush.bf16.msra.mxu0 0
      %2887 = vmatpush.bf16.msra.mxu0 0
      %2888 = vmatpush.bf16.msra.mxu0 0
      %2889 = vmatpush.bf16.msra.mxu0 %v2877
      %2890 = vmatmul.bf16.gmra.mxu0 %v2874
      %v2891 = vpop.f32.mrf.mxu0
      %v2892 = vadd.f32 0.0, %v2891
      %v2893 = vpop.f32.mrf.mxu0
      %2894 = vdwg.mxu0
      %2895 = vmatpush.bf16.msra.mxu0 0
      %2896 = vmatpush.bf16.msra.mxu0 0
      %2897 = vmatpush.bf16.msra.mxu0 0
      %2898 = vmatpush.bf16.msra.mxu0 0
      %2899 = vmatpush.bf16.msra.mxu0 0
      %2900 = vmatpush.bf16.msra.mxu0 0
      %2901 = vmatpush.bf16.msra.mxu0 0
      %2902 = vmatpush.bf16.msra.mxu0 %v2880
      %2903 = vmatmul.bf16.gmra.mxu0 %v2874
      %v2904 = vpop.f32.mrf.mxu0
      %v2905 = vadd.f32 0.0, %v2904
      %v2906 = vpop.f32.mrf.mxu0
      %2907 = vdwg.mxu0
      %v2908 = vadd.f32 %v2861, %v2892
      %v2909 = vadd.f32 %v2862, %v2905
      %s2910 = scalar_lea.vmem %s236, 96
      %v2911 = vld [vmem:[%s2910] sm:$0xf]
      %2912 = vrot.lane.b32.xlu0 %v2706, 64
      %v2913 = vpop.permute.xlu0 %2912
      %2914 = vrot.lane.b32.xlu0 %v2721, 64
      %v2915 = vpop.permute.xlu0 %2914
      %2916 = vrot.lane.b32.xlu0 %v2728, 64
      %v2917 = vpop.permute.xlu0 %2916
      %v2918 = vsel %vm741, %v2913, %v2915
      %v2919 = vsel %vm741, %v2915, %v2917
      %v2921 = vsel %vm567, %v2911, 0
      %v2924 = vsel %vm571, %v2918, 0
      %v2927 = vsel %vm571, %v2919, 0
      %2929 = vmatpush.bf16.msra.mxu0 0
      %2930 = vmatpush.bf16.msra.mxu0 0
      %2931 = vmatpush.bf16.msra.mxu0 0
      %2932 = vmatpush.bf16.msra.mxu0 0
      %2933 = vmatpush.bf16.msra.mxu0 0
      %2934 = vmatpush.bf16.msra.mxu0 0
      %2935 = vmatpush.bf16.msra.mxu0 0
      %2936 = vmatpush.bf16.msra.mxu0 %v2924
      %2937 = vmatmul.bf16.gmra.mxu0 %v2921
      %v2938 = vpop.f32.mrf.mxu0
      %v2939 = vadd.f32 0.0, %v2938
      %v2940 = vpop.f32.mrf.mxu0
      %2941 = vdwg.mxu0
      %2942 = vmatpush.bf16.msra.mxu0 0
      %2943 = vmatpush.bf16.msra.mxu0 0
      %2944 = vmatpush.bf16.msra.mxu0 0
      %2945 = vmatpush.bf16.msra.mxu0 0
      %2946 = vmatpush.bf16.msra.mxu0 0
      %2947 = vmatpush.bf16.msra.mxu0 0
      %2948 = vmatpush.bf16.msra.mxu0 0
      %2949 = vmatpush.bf16.msra.mxu0 %v2927
      %2950 = vmatmul.bf16.gmra.mxu0 %v2921
      %v2951 = vpop.f32.mrf.mxu0
      %v2952 = vadd.f32 0.0, %v2951
      %v2953 = vpop.f32.mrf.mxu0
      %2954 = vdwg.mxu0
      %v2955 = vadd.f32 %v2908, %v2939
      %v2956 = vadd.f32 %v2909, %v2952
      %v2957 = vld [vmem:[%s242] sm:$0xff]
      %2959 = vset.pattern.permute.xlu0 0
      %2960 = vperm.xlu0 %2959, %v2957
      %v2961 = vpop.permute.xlu0 %2960
      %v2963 = vadd.f32 %v2955, %v2961
      %v2964 = vadd.f32 %v2956, %v2961
      %2965 = vst [vmem:[%s252] sm:$0xff] %v2963
      %2966 = vst [vmem:[%s252 + $0x8] sm:$0xff] %v2964
      %s2967 = smul.u32 2, %s28
      %p2968 = scmp.lt.s32.totalorder %s27, 1
      %s2969 = scalar_select %p2968, %s27, 1
      %p2970 = scmp.lt.s32.totalorder %s2967, 1
      %s2971 = scalar_select %p2970, %s2967, 1
      %s2972 = smul.addr %s2969, 2
      %s2973 = sadd.s32 %s2971, %s2972
      %s2974 = smul.addr %s2973, 8
      %s2975 = scalar_lea.vmem %s4, %s2974
      // Predicated region
      $region33: #{mixed_layer_forward.1} parent=31 // pred_check
        %p2976 = pneg %p137
      $region34: #{mixed_layer_forward.1} parent=31 // pred_check_branch
        %2978 = sbr.rel (%p2976) target = $region36
      $region35: #{mixed_layer_forward.1} parent=31 // pred_region
        %s2979 = smul.u32 2, %s28
      $region36: #{mixed_layer_forward.1} parent=31 // pred_fallthru
        _
    $region32: #{mixed_layer_forward.1} parent=5 // pred_fallthru
      _
    %p2980 = scmp.le.s32.totalorder 2, %s18
    // Predicated region
    $region37: #{mixed_layer_forward.1} parent=5 // pred_check
      %p2981 = pneg %p2980
    $region38: #{mixed_layer_forward.1} parent=5 // pred_check_branch
      %2983 = sbr.rel (%p2981) target = $region40
    $region39: #{mixed_layer_forward.1} parent=5 // pred_region
      %s2984 = ssub.s32 %s18, 2
      // Predicated region
      $region41: #{mixed_layer_forward.1} parent=39 // pred_check
        %p2985 = pneg %p143
      $region42: #{mixed_layer_forward.1} parent=39 // pred_check_branch
        %2987 = sbr.rel (%p2985) target = $region44
      $region43: #{mixed_layer_forward.1} parent=39 // pred_region
        %s2988 = smul.u32 2, %s30
        %p2989 = scmp.lt.s32.totalorder %s29, 1
        %s2990 = scalar_select %p2989, %s29, 1
        %p2991 = scmp.lt.s32.totalorder %s2988, 1
        %s2992 = scalar_select %p2991, %s2988, 1
        %s2993 = smul.addr %s2990, 2
        %s2994 = sadd.s32 %s2992, %s2993
        %s2995 = smul.addr %s2994, 8
        %s2996 = scalar_lea.vmem %s4, %s2995
      $region44: #{mixed_layer_forward.1} parent=39 // pred_fallthru
        _
    $region40: #{mixed_layer_forward.1} parent=5 // pred_fallthru
      _
  $region6: #{mixed_layer_forward.1} parent=0 // loop_footer
    %s22 = sadd.s32 1, %s18
  $region7: #{mixed_layer_forward.1} parent=0 // loop_footer_branch
    %17 = sbr.rel target = $region3
  $region8: #{mixed_layer_forward.1} parent=0 // loop_exit
    _

</llo_original>
